<compile_context>
chip_gen: v7x
topology: tpu7x:2x2x1
jax: 0.10.0
libtpu: 0.0.40
codegen_flags: <defaults>
</compile_context>

<pallas_src>
import numpy as np
import jax
import jax.numpy as jnp
from jax import lax
from jax.experimental import pallas as pl
from jax.experimental.pallas import tpu as pltpu  # noqa: F401  (TPU backend)

NDF = 8
NEF = 10                  # hard-coded in the PyTorch forward: c_code.view(B, 10, 1, 1)
C_OUT = NDF * 8           # 64  conv3x3 output channels
C_IN = C_OUT + NEF        # 74  concat(h_code, c_code) channels
H = W = 4                 # spatial size of h_code
FH = FW = 8               # zero-padded frame (1 top/left, 3 bottom/right)
FSZ = FH * FW             # 64 frame positions per image
GUARD = 16                # zero guard rows around flattened frames (|shift| <= 9)
EPS = 1e-5
LEAK = 0.2

# Frame-position validity mask (1.0 inside the original 4x4 window) — host-side constant.
_MASK_NP = np.zeros((FH, FW), np.float32)
_MASK_NP[1:1 + H, 1:1 + W] = 1.0
_FRAME_MASK = _MASK_NP.reshape(FSZ, 1)


def _kernel(x_ref, w1_ref, gamma_ref, beta_ref, w2_ref, mask_ref, bias_ref, out_ref):
    # x_ref:      (GUARD + B*FSZ + GUARD, C_IN) f32  flattened zero-padded frames
    # w1_ref:     (9, C_IN, C_OUT)              bf16 conv3x3 weight per tap [ky*3+kx]
    # gamma/beta: (1, C_OUT)                    f32  BatchNorm affine params
    # w2_ref:     (FSZ, C_OUT)                  f32  4x4/stride-4 conv weight in frame
    #                                                layout, zero at invalid positions
    # mask_ref:   (FSZ, 1)                      f32  1.0 at valid frame positions
    # bias_ref:   (1, 1)                        f32  conv2 bias
    # out_ref:    (B, 1)                        f32  logits
    B = out_ref.shape[0]
    rows = B * FSZ

    # conv3x3 (padding=1) as 9 accumulating MXU dots over row-shifted frame views.
    acc = jnp.zeros((rows, C_OUT), jnp.float32)
    for t in range(9):
        ky, kx = t // 3, t % 3
        shift = (ky - 1) * FW + (kx - 1)                              # -9 .. +9 (static)
        xs = x_ref[pl.ds(GUARD + shift, rows), :].astype(jnp.bfloat16)
        acc = acc + jnp.dot(xs, w1_ref[t], preferred_element_type=jnp.float32)

    acc3 = acc.reshape(B, FSZ, C_OUT)      # layout-preserving split (FSZ % 8 == 0)

    # BatchNorm2d (training mode): single-pass biased stats over B*H*W valid positions.
    n_valid = B * H * W
    ym = acc3 * mask_ref[...]                                          # zero out borders
    s1 = jnp.sum(jnp.sum(ym, axis=0), axis=0, keepdims=True)           # (1, C_OUT)
    s2 = jnp.sum(jnp.sum(ym * ym, axis=0), axis=0, keepdims=True)      # (1, C_OUT)
    mean = s1 * (1.0 / n_valid)
    var = s2 * (1.0 / n_valid) - mean * mean
    scale = gamma_ref[...] * lax.rsqrt(var + EPS)                      # gamma folded in
    shiftv = beta_ref[...] - mean * scale

    z = acc3 * scale + shiftv
    act = jnp.where(z >= 0, z, LEAK * z)                               # LeakyReLU(0.2)

    # Conv2d(C_OUT, 1, kernel=4, stride=4) on the 4x4 map == masked weighted sum.
    prod = act * w2_ref[...]                                           # (B, FSZ, C_OUT)
    per_ch = jnp.sum(prod, axis=1)                                     # (B, C_OUT)
    out_ref[...] = jnp.sum(per_ch, axis=1, keepdims=True) + bias_ref[...]


@jax.jit
def d_get_logits(h_code, c_code, params):
    """h_code: (B, ndf*8, 4, 4) NCHW; c_code: (B, 10). Returns (B,) logits."""
    w1, gamma, beta, w2, b2 = params
    B = h_code.shape[0]

    # ---- layout glue only (fused by XLA under jit) ----
    h_nhwc = jnp.transpose(h_code, (0, 2, 3, 1))                              # (B,4,4,64)
    c_rep = jnp.broadcast_to(c_code.reshape(B, 1, 1, NEF), (B, H, W, NEF))    # repeat(1,1,4,4)
    x = jnp.concatenate([h_nhwc, c_rep], axis=-1)                             # (B,4,4,74)
    frame = jnp.pad(x, ((0, 0), (1, FH - 1 - H), (1, FW - 1 - W), (0, 0)))    # (B,8,8,74)
    x_ext = jnp.pad(frame.reshape(B * FSZ, C_IN).astype(jnp.float32),
                    ((GUARD, GUARD), (0, 0)))                                 # (B*64+32, 74)

    w1b = jnp.transpose(w1, (2, 3, 1, 0)).reshape(9, C_IN, C_OUT).astype(jnp.bfloat16)

    gamma_p = gamma.reshape(1, C_OUT).astype(jnp.float32)
    beta_p = beta.reshape(1, C_OUT).astype(jnp.float32)

    w2f = jnp.pad(jnp.transpose(w2[0], (1, 2, 0)),                            # (4,4,64)
                  ((1, FH - 1 - H), (1, FW - 1 - W), (0, 0)))                 # (8,8,64)
    w2f = w2f.reshape(FSZ, C_OUT).astype(jnp.float32)

    maskf = jnp.asarray(_FRAME_MASK)                                          # (64,1)
    bias = b2.reshape(1, 1).astype(jnp.float32)

    out = pl.pallas_call(
        _kernel,
        out_shape=jax.ShapeDtypeStruct((B, 1), jnp.float32),
    )(x_ext, w1b, gamma_p, beta_p, w2f, maskf, bias)
    return out.reshape(-1)                                                    # output.view(-1)


def reference(h_code, c_code, params):
    """Pure-JAX reference replicating the PyTorch forward (training-mode BN)."""
    w1, gamma, beta, w2, b2 = params
    B = h_code.shape[0]
    cc = jnp.broadcast_to(c_code.reshape(B, NEF, 1, 1), (B, NEF, H, W))
    x = jnp.concatenate([h_code, cc], axis=1)
    y = lax.conv_general_dilated(x, w1, (1, 1), ((1, 1), (1, 1)),
                                 dimension_numbers=('NCHW', 'OIHW', 'NCHW'))
    mean = jnp.mean(y, axis=(0, 2, 3), keepdims=True)
    var = jnp.mean((y - mean) ** 2, axis=(0, 2, 3), keepdims=True)
    z = (y - mean) / jnp.sqrt(var + EPS) * gamma.reshape(1, -1, 1, 1) + beta.reshape(1, -1, 1, 1)
    a = jnp.where(z >= 0, z, LEAK * z)
    o = lax.conv_general_dilated(a, w2, (4, 4), 'VALID',
                                 dimension_numbers=('NCHW', 'OIHW', 'NCHW'))
    return (o + b2.reshape(1, 1, 1, 1)).reshape(-1)


if __name__ == "__main__":
    key = jax.random.PRNGKey(0)
    ks = jax.random.split(key, 7)
    B = 2
    # deterministic example inputs (shapes implied by the module: 4x4 feature maps)
    h_code = jax.random.normal(ks[0], (B, C_OUT, H, W), jnp.float32)
    c_code = jax.random.normal(ks[1], (B, NEF), jnp.float32)
    # deterministic synthetic parameters (shapes from __init__)
    w1 = jax.random.normal(ks[2], (C_OUT, C_IN, 3, 3), jnp.float32) * 0.05   # conv3x3, bias=False
    gamma = 1.0 + 0.1 * jax.random.normal(ks[3], (C_OUT,), jnp.float32)      # BatchNorm2d weight
    beta = 0.1 * jax.random.normal(ks[4], (C_OUT,), jnp.float32)             # BatchNorm2d bias
    w2 = jax.random.normal(ks[5], (1, C_OUT, 4, 4), jnp.float32) * 0.05      # Conv2d k=4 s=4
    b2 = 0.1 * jax.random.normal(ks[6], (1,), jnp.float32)                   # its bias
    params = (w1, gamma, beta, w2, b2)

    out = jax.block_until_ready(d_get_logits(h_code, c_code, params))
    ref = reference(h_code, c_code, params)
    assert out.shape == (B,)
    np.testing.assert_allclose(np.asarray(out), np.asarray(ref), rtol=5e-2, atol=5e-2)
    print("KERNEL_OK")
</pallas_src>

<mosaic_0001>
module attributes {stable_mosaic.version = 11 : i64} {
  func.func @_kernel(%arg0: memref<160x74xf32, #tpu.memory_space<vmem>>, %arg1: memref<9x74x64xbf16, #tpu.memory_space<vmem>>, %arg2: memref<1x64xf32, #tpu.memory_space<vmem>>, %arg3: memref<1x64xf32, #tpu.memory_space<vmem>>, %arg4: memref<64x64xf32, #tpu.memory_space<vmem>>, %arg5: memref<64x1xf32, #tpu.memory_space<vmem>>, %arg6: memref<1x1xf32, #tpu.memory_space<vmem>>, %arg7: memref<2x1xf32, #tpu.memory_space<vmem>>) attributes {dimension_semantics = [], scalar_prefetch = 0 : i64, scratch_operands = 0 : i64, tpu.core_type = #tpu.core_type<tc>} {
    %cst = arith.constant 0.000000e+00 : f32
    %0 = vector.broadcast %cst : f32 to vector<128x64xf32>
    %c7 = arith.constant 7 : index
    %c0 = arith.constant 0 : index
    %1 = vector.load %arg0[%c7, %c0] : memref<160x74xf32, #tpu.memory_space<vmem>>, vector<128x74xf32>
    %2 = arith.truncf %1 : vector<128x74xf32> to vector<128x74xbf16>
    %c0_0 = arith.constant 0 : index
    %c0_1 = arith.constant 0 : index
    %c0_2 = arith.constant 0 : index
    %3 = vector.load %arg1[%c0_0, %c0_1, %c0_2] : memref<9x74x64xbf16, #tpu.memory_space<vmem>>, vector<1x74x64xbf16>
    %4 = vector.shape_cast %3 : vector<1x74x64xbf16> to vector<74x64xbf16>
    %cst_3 = arith.constant dense<0.000000e+00> : vector<128x64xf32>
    %5 = tpu.matmul %2, %4, %cst_3 {dimension_numbers = #tpu.dot_dimension_numbers<[1], [0], [0], [1], [0, 0, 1, 1], [], []>} : vector<128x74xbf16>, vector<74x64xbf16>, vector<128x64xf32> -> vector<128x64xf32>
    %6 = arith.addf %0, %5 : vector<128x64xf32>
    %c8 = arith.constant 8 : index
    %c0_4 = arith.constant 0 : index
    %7 = vector.load %arg0[%c8, %c0_4] : memref<160x74xf32, #tpu.memory_space<vmem>>, vector<128x74xf32>
    %8 = arith.truncf %7 : vector<128x74xf32> to vector<128x74xbf16>
    %c1 = arith.constant 1 : index
    %c0_5 = arith.constant 0 : index
    %c0_6 = arith.constant 0 : index
    %9 = vector.load %arg1[%c1, %c0_5, %c0_6] : memref<9x74x64xbf16, #tpu.memory_space<vmem>>, vector<1x74x64xbf16>
    %10 = vector.shape_cast %9 : vector<1x74x64xbf16> to vector<74x64xbf16>
    %cst_7 = arith.constant dense<0.000000e+00> : vector<128x64xf32>
    %11 = tpu.matmul %8, %10, %cst_7 {dimension_numbers = #tpu.dot_dimension_numbers<[1], [0], [0], [1], [0, 0, 1, 1], [], []>} : vector<128x74xbf16>, vector<74x64xbf16>, vector<128x64xf32> -> vector<128x64xf32>
    %12 = arith.addf %6, %11 : vector<128x64xf32>
    %c9 = arith.constant 9 : index
    %c0_8 = arith.constant 0 : index
    %13 = vector.load %arg0[%c9, %c0_8] : memref<160x74xf32, #tpu.memory_space<vmem>>, vector<128x74xf32>
    %14 = arith.truncf %13 : vector<128x74xf32> to vector<128x74xbf16>
    %c2 = arith.constant 2 : index
    %c0_9 = arith.constant 0 : index
    %c0_10 = arith.constant 0 : index
    %15 = vector.load %arg1[%c2, %c0_9, %c0_10] : memref<9x74x64xbf16, #tpu.memory_space<vmem>>, vector<1x74x64xbf16>
    %16 = vector.shape_cast %15 : vector<1x74x64xbf16> to vector<74x64xbf16>
    %cst_11 = arith.constant dense<0.000000e+00> : vector<128x64xf32>
    %17 = tpu.matmul %14, %16, %cst_11 {dimension_numbers = #tpu.dot_dimension_numbers<[1], [0], [0], [1], [0, 0, 1, 1], [], []>} : vector<128x74xbf16>, vector<74x64xbf16>, vector<128x64xf32> -> vector<128x64xf32>
    %18 = arith.addf %12, %17 : vector<128x64xf32>
    %c15 = arith.constant 15 : index
    %c0_12 = arith.constant 0 : index
    %19 = vector.load %arg0[%c15, %c0_12] : memref<160x74xf32, #tpu.memory_space<vmem>>, vector<128x74xf32>
    %20 = arith.truncf %19 : vector<128x74xf32> to vector<128x74xbf16>
    %c3 = arith.constant 3 : index
    %c0_13 = arith.constant 0 : index
    %c0_14 = arith.constant 0 : index
    %21 = vector.load %arg1[%c3, %c0_13, %c0_14] : memref<9x74x64xbf16, #tpu.memory_space<vmem>>, vector<1x74x64xbf16>
    %22 = vector.shape_cast %21 : vector<1x74x64xbf16> to vector<74x64xbf16>
    %cst_15 = arith.constant dense<0.000000e+00> : vector<128x64xf32>
    %23 = tpu.matmul %20, %22, %cst_15 {dimension_numbers = #tpu.dot_dimension_numbers<[1], [0], [0], [1], [0, 0, 1, 1], [], []>} : vector<128x74xbf16>, vector<74x64xbf16>, vector<128x64xf32> -> vector<128x64xf32>
    %24 = arith.addf %18, %23 : vector<128x64xf32>
    %c16 = arith.constant 16 : index
    %c0_16 = arith.constant 0 : index
    %25 = vector.load %arg0[%c16, %c0_16] : memref<160x74xf32, #tpu.memory_space<vmem>>, vector<128x74xf32>
    %26 = arith.truncf %25 : vector<128x74xf32> to vector<128x74xbf16>
    %c4 = arith.constant 4 : index
    %c0_17 = arith.constant 0 : index
    %c0_18 = arith.constant 0 : index
    %27 = vector.load %arg1[%c4, %c0_17, %c0_18] : memref<9x74x64xbf16, #tpu.memory_space<vmem>>, vector<1x74x64xbf16>
    %28 = vector.shape_cast %27 : vector<1x74x64xbf16> to vector<74x64xbf16>
    %cst_19 = arith.constant dense<0.000000e+00> : vector<128x64xf32>
    %29 = tpu.matmul %26, %28, %cst_19 {dimension_numbers = #tpu.dot_dimension_numbers<[1], [0], [0], [1], [0, 0, 1, 1], [], []>} : vector<128x74xbf16>, vector<74x64xbf16>, vector<128x64xf32> -> vector<128x64xf32>
    %30 = arith.addf %24, %29 : vector<128x64xf32>
    %c17 = arith.constant 17 : index
    %c0_20 = arith.constant 0 : index
    %31 = vector.load %arg0[%c17, %c0_20] : memref<160x74xf32, #tpu.memory_space<vmem>>, vector<128x74xf32>
    %32 = arith.truncf %31 : vector<128x74xf32> to vector<128x74xbf16>
    %c5 = arith.constant 5 : index
    %c0_21 = arith.constant 0 : index
    %c0_22 = arith.constant 0 : index
    %33 = vector.load %arg1[%c5, %c0_21, %c0_22] : memref<9x74x64xbf16, #tpu.memory_space<vmem>>, vector<1x74x64xbf16>
    %34 = vector.shape_cast %33 : vector<1x74x64xbf16> to vector<74x64xbf16>
    %cst_23 = arith.constant dense<0.000000e+00> : vector<128x64xf32>
    %35 = tpu.matmul %32, %34, %cst_23 {dimension_numbers = #tpu.dot_dimension_numbers<[1], [0], [0], [1], [0, 0, 1, 1], [], []>} : vector<128x74xbf16>, vector<74x64xbf16>, vector<128x64xf32> -> vector<128x64xf32>
    %36 = arith.addf %30, %35 : vector<128x64xf32>
    %c23 = arith.constant 23 : index
    %c0_24 = arith.constant 0 : index
    %37 = vector.load %arg0[%c23, %c0_24] : memref<160x74xf32, #tpu.memory_space<vmem>>, vector<128x74xf32>
    %38 = arith.truncf %37 : vector<128x74xf32> to vector<128x74xbf16>
    %c6 = arith.constant 6 : index
    %c0_25 = arith.constant 0 : index
    %c0_26 = arith.constant 0 : index
    %39 = vector.load %arg1[%c6, %c0_25, %c0_26] : memref<9x74x64xbf16, #tpu.memory_space<vmem>>, vector<1x74x64xbf16>
    %40 = vector.shape_cast %39 : vector<1x74x64xbf16> to vector<74x64xbf16>
    %cst_27 = arith.constant dense<0.000000e+00> : vector<128x64xf32>
    %41 = tpu.matmul %38, %40, %cst_27 {dimension_numbers = #tpu.dot_dimension_numbers<[1], [0], [0], [1], [0, 0, 1, 1], [], []>} : vector<128x74xbf16>, vector<74x64xbf16>, vector<128x64xf32> -> vector<128x64xf32>
    %42 = arith.addf %36, %41 : vector<128x64xf32>
    %c24 = arith.constant 24 : index
    %c0_28 = arith.constant 0 : index
    %43 = vector.load %arg0[%c24, %c0_28] : memref<160x74xf32, #tpu.memory_space<vmem>>, vector<128x74xf32>
    %44 = arith.truncf %43 : vector<128x74xf32> to vector<128x74xbf16>
    %c7_29 = arith.constant 7 : index
    %c0_30 = arith.constant 0 : index
    %c0_31 = arith.constant 0 : index
    %45 = vector.load %arg1[%c7_29, %c0_30, %c0_31] : memref<9x74x64xbf16, #tpu.memory_space<vmem>>, vector<1x74x64xbf16>
    %46 = vector.shape_cast %45 : vector<1x74x64xbf16> to vector<74x64xbf16>
    %cst_32 = arith.constant dense<0.000000e+00> : vector<128x64xf32>
    %47 = tpu.matmul %44, %46, %cst_32 {dimension_numbers = #tpu.dot_dimension_numbers<[1], [0], [0], [1], [0, 0, 1, 1], [], []>} : vector<128x74xbf16>, vector<74x64xbf16>, vector<128x64xf32> -> vector<128x64xf32>
    %48 = arith.addf %42, %47 : vector<128x64xf32>
    %c25 = arith.constant 25 : index
    %c0_33 = arith.constant 0 : index
    %49 = vector.load %arg0[%c25, %c0_33] : memref<160x74xf32, #tpu.memory_space<vmem>>, vector<128x74xf32>
    %50 = arith.truncf %49 : vector<128x74xf32> to vector<128x74xbf16>
    %c8_34 = arith.constant 8 : index
    %c0_35 = arith.constant 0 : index
    %c0_36 = arith.constant 0 : index
    %51 = vector.load %arg1[%c8_34, %c0_35, %c0_36] : memref<9x74x64xbf16, #tpu.memory_space<vmem>>, vector<1x74x64xbf16>
    %52 = vector.shape_cast %51 : vector<1x74x64xbf16> to vector<74x64xbf16>
    %cst_37 = arith.constant dense<0.000000e+00> : vector<128x64xf32>
    %53 = tpu.matmul %50, %52, %cst_37 {dimension_numbers = #tpu.dot_dimension_numbers<[1], [0], [0], [1], [0, 0, 1, 1], [], []>} : vector<128x74xbf16>, vector<74x64xbf16>, vector<128x64xf32> -> vector<128x64xf32>
    %54 = arith.addf %48, %53 : vector<128x64xf32>
    %55 = vector.shape_cast %54 : vector<128x64xf32> to vector<2x64x64xf32>
    %c0_38 = arith.constant 0 : index
    %c0_39 = arith.constant 0 : index
    %56 = vector.load %arg5[%c0_38, %c0_39] : memref<64x1xf32, #tpu.memory_space<vmem>>, vector<64x1xf32>
    %57 = vector.shape_cast %56 : vector<64x1xf32> to vector<1x64x1xf32>
    %58 = vector.broadcast %57 : vector<1x64x1xf32> to vector<2x64x64xf32>
    %59 = arith.mulf %55, %58 : vector<2x64x64xf32>
    %cst_40 = arith.constant dense<0.000000e+00> : vector<64x64xf32>
    %60 = vector.multi_reduction <add>, %59, %cst_40 [0] : vector<2x64x64xf32> to vector<64x64xf32>
    %cst_41 = arith.constant dense<0.000000e+00> : vector<64xf32>
    %61 = vector.multi_reduction <add>, %60, %cst_41 [0] : vector<64x64xf32> to vector<64xf32>
    %62 = vector.shape_cast %61 : vector<64xf32> to vector<1x64xf32>
    %63 = arith.mulf %59, %59 : vector<2x64x64xf32>
    %cst_42 = arith.constant dense<0.000000e+00> : vector<64x64xf32>
    %64 = vector.multi_reduction <add>, %63, %cst_42 [0] : vector<2x64x64xf32> to vector<64x64xf32>
    %cst_43 = arith.constant dense<0.000000e+00> : vector<64xf32>
    %65 = vector.multi_reduction <add>, %64, %cst_43 [0] : vector<64x64xf32> to vector<64xf32>
    %66 = vector.shape_cast %65 : vector<64xf32> to vector<1x64xf32>
    %cst_44 = arith.constant 3.125000e-02 : f32
    %67 = vector.broadcast %cst_44 : f32 to vector<1x64xf32>
    %68 = arith.mulf %62, %67 : vector<1x64xf32>
    %cst_45 = arith.constant 3.125000e-02 : f32
    %69 = vector.broadcast %cst_45 : f32 to vector<1x64xf32>
    %70 = arith.mulf %66, %69 : vector<1x64xf32>
    %71 = arith.mulf %68, %68 : vector<1x64xf32>
    %72 = arith.subf %70, %71 : vector<1x64xf32>
    %c0_46 = arith.constant 0 : index
    %c0_47 = arith.constant 0 : index
    %73 = vector.load %arg2[%c0_46, %c0_47] : memref<1x64xf32, #tpu.memory_space<vmem>>, vector<1x64xf32>
    %cst_48 = arith.constant 9.99999974E-6 : f32
    %74 = vector.broadcast %cst_48 : f32 to vector<1x64xf32>
    %75 = arith.addf %72, %74 : vector<1x64xf32>
    %76 = math.rsqrt %75 : vector<1x64xf32>
    %77 = arith.mulf %73, %76 : vector<1x64xf32>
    %c0_49 = arith.constant 0 : index
    %c0_50 = arith.constant 0 : index
    %78 = vector.load %arg3[%c0_49, %c0_50] : memref<1x64xf32, #tpu.memory_space<vmem>>, vector<1x64xf32>
    %79 = arith.mulf %68, %77 : vector<1x64xf32>
    %80 = arith.subf %78, %79 : vector<1x64xf32>
    %81 = vector.shape_cast %77 : vector<1x64xf32> to vector<1x1x64xf32>
    %82 = vector.broadcast %81 : vector<1x1x64xf32> to vector<2x64x64xf32>
    %83 = arith.mulf %55, %82 : vector<2x64x64xf32>
    %84 = vector.shape_cast %80 : vector<1x64xf32> to vector<1x1x64xf32>
    %85 = vector.broadcast %84 : vector<1x1x64xf32> to vector<2x64x64xf32>
    %86 = arith.addf %83, %85 : vector<2x64x64xf32>
    %cst_51 = arith.constant 0.000000e+00 : f32
    %87 = vector.broadcast %cst_51 : f32 to vector<2x64x64xf32>
    %88 = arith.cmpf oge, %86, %87 : vector<2x64x64xf32>
    %cst_52 = arith.constant 2.000000e-01 : f32
    %89 = vector.broadcast %cst_52 : f32 to vector<2x64x64xf32>
    %90 = arith.mulf %89, %86 : vector<2x64x64xf32>
    %91 = arith.select %88, %86, %90 : vector<2x64x64xi1>, vector<2x64x64xf32>
    %c0_53 = arith.constant 0 : index
    %c0_54 = arith.constant 0 : index
    %92 = vector.load %arg4[%c0_53, %c0_54] : memref<64x64xf32, #tpu.memory_space<vmem>>, vector<64x64xf32>
    %93 = vector.shape_cast %92 : vector<64x64xf32> to vector<1x64x64xf32>
    %94 = vector.broadcast %93 : vector<1x64x64xf32> to vector<2x64x64xf32>
    %95 = arith.mulf %91, %94 : vector<2x64x64xf32>
    %cst_55 = arith.constant dense<0.000000e+00> : vector<2x64xf32>
    %96 = vector.multi_reduction <add>, %95, %cst_55 [1] : vector<2x64x64xf32> to vector<2x64xf32>
    %cst_56 = arith.constant dense<0.000000e+00> : vector<2xf32>
    %97 = vector.multi_reduction <add>, %96, %cst_56 [1] : vector<2x64xf32> to vector<2xf32>
    %98 = vector.shape_cast %97 : vector<2xf32> to vector<2x1xf32>
    %c0_57 = arith.constant 0 : index
    %c0_58 = arith.constant 0 : index
    %99 = vector.load %arg6[%c0_57, %c0_58] : memref<1x1xf32, #tpu.memory_space<vmem>>, vector<1x1xf32>
    %100 = vector.broadcast %99 : vector<1x1xf32> to vector<2x1xf32>
    %101 = arith.addf %98, %100 : vector<2x1xf32>
    %c0_59 = arith.constant 0 : index
    %c0_60 = arith.constant 0 : index
    %102 = vector.load %arg7[%c0_59, %c0_60] : memref<2x1xf32, #tpu.memory_space<vmem>>, vector<2x1xf32>
    tpu.vector_store %arg7[%c0_59, %c0_60], %101 {strides = array<i32>} : memref<2x1xf32, #tpu.memory_space<vmem>>, vector<2x1xf32>,
    return
  }
}

</mosaic_0001>

<llo_original>
// kernel: d_get_logits.1
$region0: #{d_get_logits.1}
  #allocation0 [shape = 'u32[]', space=smem, size = 0x4, offset = 0x4, fixed_abs, tag = 'smem constant byte address 0x4 - core index']
  #allocation1 [shape = 'u32[144,128]{1,0:T(1,128)}', space=vmem, size = 0x12000, scoped, tag = 'internal scratch']
  #allocation2 [shape = 'f32[1,1]{1,0:T(1,128)S(1)}', space=vmem, size = 0x200, scoped, tag = 'scoped memory for d_get_logits.1']
  %s0 = inlined_call_operand.vmem [shape: f32[160,74], index: 0, kind: input, shape index: {}]
  %s1 = inlined_call_operand.vmem [shape: bf16[9,74,64], index: 1, kind: input, shape index: {}]
  %s2 = inlined_call_operand.vmem [shape: f32[1,64], index: 2, kind: input, shape index: {}]
  %s3 = inlined_call_operand.vmem [shape: f32[1,64], index: 3, kind: input, shape index: {}]
  %s4 = inlined_call_operand.vmem [shape: f32[64,64], index: 4, kind: input, shape index: {}]
  %s5 = inlined_call_operand.vmem [shape: f32[64,1], index: 5, kind: input, shape index: {}]
  %s6 = inlined_call_operand.<no memory space> [shape: f32[1,1], index: 6, kind: input, shape index: {}]
  %s7 = inlined_call_operand.vmem [shape: f32[2,1], index: 7, kind: output, shape index: {}]
  %s8 = sld [smem:[#allocation0]]
  $region38: #{d_get_logits.1} parent=0
    _
  %s10 = ssub.s32 1, %s8
  %s11 = scalar_select 0, %s10, %s8
  %v12 = vstv %s6
  %13 = vst [vmem:[#allocation2] sm:$0x1] %v12
  // Predicated region
  $region2: #{d_get_logits.1} parent=0 // pred_check
    _
  $region3: #{d_get_logits.1} parent=0 // pred_check_branch
    %15 = sbr.rel (0) target = $region5
  $region4: #{d_get_logits.1} parent=0 // pred_region
    _
  $region5: #{d_get_logits.1} parent=0 // pred_fallthru
    _
  // Predicated region
  $region6: #{d_get_logits.1} parent=0 // pred_check
    _
  $region7: #{d_get_logits.1} parent=0 // pred_check_branch
    %17 = sbr.rel (0) target = $region9
  $region8: #{d_get_logits.1} parent=0 // pred_region
    _
  $region9: #{d_get_logits.1} parent=0 // pred_fallthru
    _
  // Predicated region
  $region10: #{d_get_logits.1} parent=0 // pred_check
    _
  $region11: #{d_get_logits.1} parent=0 // pred_check_branch
    %19 = sbr.rel (0) target = $region13
  $region12: #{d_get_logits.1} parent=0 // pred_region
    _
  $region13: #{d_get_logits.1} parent=0 // pred_fallthru
    _
  // Predicated region
  $region14: #{d_get_logits.1} parent=0 // pred_check
    _
  $region15: #{d_get_logits.1} parent=0 // pred_check_branch
    %21 = sbr.rel (0) target = $region17
  $region16: #{d_get_logits.1} parent=0 // pred_region
    _
  $region17: #{d_get_logits.1} parent=0 // pred_fallthru
    _
  // Predicated region
  $region18: #{d_get_logits.1} parent=0 // pred_check
    _
  $region19: #{d_get_logits.1} parent=0 // pred_check_branch
    %23 = sbr.rel (0) target = $region21
  $region20: #{d_get_logits.1} parent=0 // pred_region
    _
  $region21: #{d_get_logits.1} parent=0 // pred_fallthru
    _
  // Predicated region
  $region22: #{d_get_logits.1} parent=0 // pred_check
    _
  $region23: #{d_get_logits.1} parent=0 // pred_check_branch
    %25 = sbr.rel (0) target = $region25
  $region24: #{d_get_logits.1} parent=0 // pred_region
    _
  $region25: #{d_get_logits.1} parent=0 // pred_fallthru
    _
  // Predicated region
  $region26: #{d_get_logits.1} parent=0 // pred_check
    _
  $region27: #{d_get_logits.1} parent=0 // pred_check_branch
    %27 = sbr.rel (0) target = $region29
  $region28: #{d_get_logits.1} parent=0 // pred_region
    _
  $region29: #{d_get_logits.1} parent=0 // pred_fallthru
    _
  %v29 = vld [vmem:[%s0 + $0x7] sm:$0xff]
  %v30 = vld [vmem:[%s0 + $0xf] sm:$0xff]
  %v31 = vld [vmem:[%s0 + $0x17] sm:$0xff]
  %v32 = vld [vmem:[%s0 + $0x1f] sm:$0xff]
  %v33 = vld [vmem:[%s0 + $0x27] sm:$0xff]
  %v34 = vld [vmem:[%s0 + $0x2f] sm:$0xff]
  %v35 = vld [vmem:[%s0 + $0x37] sm:$0xff]
  %v36 = vld [vmem:[%s0 + $0x3f] sm:$0xff]
  %v37 = vld [vmem:[%s0 + $0x47] sm:$0xff]
  %v38 = vld [vmem:[%s0 + $0x4f] sm:$0xff]
  %v39 = vld [vmem:[%s0 + $0x57] sm:$0xff]
  %v40 = vld [vmem:[%s0 + $0x5f] sm:$0xff]
  %v41 = vld [vmem:[%s0 + $0x67] sm:$0xff]
  %v42 = vld [vmem:[%s0 + $0x6f] sm:$0xff]
  %v43 = vld [vmem:[%s0 + $0x77] sm:$0xff]
  %v44 = vld [vmem:[%s0 + $0x7f] sm:$0xff]
  %v45 = vpack.c.bf16 %v30, %v29
  %v46 = vpack.c.bf16 %v32, %v31
  %v47 = vpack.c.bf16 %v34, %v33
  %v48 = vpack.c.bf16 %v36, %v35
  %v49 = vpack.c.bf16 %v38, %v37
  %v50 = vpack.c.bf16 %v40, %v39
  %v51 = vpack.c.bf16 %v42, %v41
  %v52 = vpack.c.bf16 %v44, %v43
  %v53 = vld [vmem:[%s1] sm:$0xf]
  %v54 = vld [vmem:[%s1 + $0x4] sm:$0xf]
  %v55 = vld [vmem:[%s1 + $0x8] sm:$0xf]
  %v56 = vld [vmem:[%s1 + $0xc] sm:$0xf]
  %v57 = vld [vmem:[%s1 + $0x10] sm:$0xf]
  %v58 = vld [vmem:[%s1 + $0x14] sm:$0xf]
  %v59 = vld [vmem:[%s1 + $0x18] sm:$0xf]
  %v60 = vld [vmem:[%s1 + $0x1c] sm:$0xf]
  %v61 = vld [vmem:[%s1 + $0x20] sm:$0xf]
  %v62 = vld [vmem:[%s1 + $0x24] sm:$0x1]
  %v63 = vld [vmem:[%s0 + $0x8] sm:$0xff]
  %v64 = vld [vmem:[%s0 + $0x10] sm:$0xff]
  %v65 = vld [vmem:[%s0 + $0x18] sm:$0xff]
  %v66 = vld [vmem:[%s0 + $0x20] sm:$0xff]
  %v67 = vld [vmem:[%s0 + $0x28] sm:$0xff]
  %v68 = vld [vmem:[%s0 + $0x30] sm:$0xff]
  %v69 = vld [vmem:[%s0 + $0x38] sm:$0xff]
  %v70 = vld [vmem:[%s0 + $0x40] sm:$0xff]
  %v71 = vld [vmem:[%s0 + $0x48] sm:$0xff]
  %v72 = vld [vmem:[%s0 + $0x50] sm:$0xff]
  %v73 = vld [vmem:[%s0 + $0x58] sm:$0xff]
  %v74 = vld [vmem:[%s0 + $0x60] sm:$0xff]
  %v75 = vld [vmem:[%s0 + $0x68] sm:$0xff]
  %v76 = vld [vmem:[%s0 + $0x70] sm:$0xff]
  %v77 = vld [vmem:[%s0 + $0x78] sm:$0xff]
  %v78 = vld [vmem:[%s0 + $0x80] sm:$0xff]
  %v79 = vpack.c.bf16 %v64, %v63
  %v80 = vpack.c.bf16 %v66, %v65
  %v81 = vpack.c.bf16 %v68, %v67
  %v82 = vpack.c.bf16 %v70, %v69
  %v83 = vpack.c.bf16 %v72, %v71
  %v84 = vpack.c.bf16 %v74, %v73
  %v85 = vpack.c.bf16 %v76, %v75
  %v86 = vpack.c.bf16 %v78, %v77
  %s87 = scalar_lea.vmem %s1, 40
  %v88 = vld [vmem:[%s87] sm:$0xf]
  %v89 = vld [vmem:[%s87 + $0x4] sm:$0xf]
  %v90 = vld [vmem:[%s87 + $0x8] sm:$0xf]
  %v91 = vld [vmem:[%s87 + $0xc] sm:$0xf]
  %v92 = vld [vmem:[%s87 + $0x10] sm:$0xf]
  %v93 = vld [vmem:[%s87 + $0x14] sm:$0xf]
  %v94 = vld [vmem:[%s87 + $0x18] sm:$0xf]
  %v95 = vld [vmem:[%s87 + $0x1c] sm:$0xf]
  %v96 = vld [vmem:[%s87 + $0x20] sm:$0xf]
  %v97 = vld [vmem:[%s87 + $0x24] sm:$0x1]
  %v108 = vunpack.c.l.b16 %v88
  %v109 = vunpack.c.l.b16 %v89
  %v110 = vunpack.c.l.b16 %v90
  %v111 = vunpack.c.l.b16 %v91
  %v112 = vunpack.c.l.b16 %v92
  %v113 = vunpack.c.l.b16 %v93
  %v114 = vunpack.c.l.b16 %v94
  %v115 = vunpack.c.l.b16 %v95
  %v116 = vunpack.c.l.b16 %v96
  %v117 = vunpack.c.l.b16 %v97
  %v118 = vpack.c.b16 %v109, %v108
  %v119 = vpack.c.b16 %v111, %v110
  %v120 = vpack.c.b16 %v113, %v112
  %v121 = vpack.c.b16 %v115, %v114
  %v122 = vpack.c.b16 %v117, %v116
  %vm127 = vcmask 605184
  %v129 = vsel %vm127, %v79, 0
  %v132 = vsel %vm127, %v80, 0
  %v135 = vsel %vm127, %v81, 0
  %v138 = vsel %vm127, %v82, 0
  %v141 = vsel %vm127, %v83, 0
  %v144 = vsel %vm127, %v84, 0
  %v147 = vsel %vm127, %v85, 0
  %v150 = vsel %vm127, %v86, 0
  %vm152 = vcmask 1044480
  %v154 = vsel %vm152, %v122, 0
  %156 = vmatprep.subr.bf16.mxu0 0
  %157 = vmatpush1.bf16.msra.mxu0 %v118
  %158 = vmatprep.subr.bf16.mxu0 0
  %159 = vmatpush1.bf16.msra.mxu0 %v119
  %160 = vmatprep.subr.bf16.mxu0 0
  %161 = vmatpush1.bf16.msra.mxu0 %v120
  %162 = vmatprep.subr.bf16.mxu0 0
  %163 = vmatpush1.bf16.msra.mxu0 %v121
  %164 = vmatprep.subr.bf16.mxu0 0
  %165 = vmatpush1.bf16.msra.mxu0 %v154
  %166 = vmatprep.subr.bf16.mxu0 0
  %167 = vmatpush1.bf16.msra.mxu0 0
  %168 = vmatprep.subr.bf16.mxu0 0
  %169 = vmatpush1.bf16.msra.mxu0 0
  %170 = vmatprep.subr.bf16.mxu0 0
  %171 = vmatpush1.bf16.msra.mxu0 0
  %172 = vmatprep.subr.bf16.mxu0 0
  %173 = vmatpush1.bf16.msra.mxu0 0
  %174 = vmatprep.subr.bf16.mxu0 0
  %175 = vmatpush1.bf16.msra.mxu0 0
  %176 = vmatprep.subr.bf16.mxu0 0
  %177 = vmatpush1.bf16.msra.mxu0 0
  %178 = vmatprep.subr.bf16.mxu0 0
  %179 = vmatpush1.bf16.msra.mxu0 0
  %180 = vmatprep.subr.bf16.mxu0 0
  %181 = vmatpush1.bf16.msra.mxu0 0
  %182 = vmatprep.subr.bf16.mxu0 0
  %183 = vmatpush1.bf16.msra.mxu0 0
  %184 = vmatprep.subr.bf16.mxu0 0
  %185 = vmatpush1.bf16.msra.mxu0 0
  %186 = vmatprep.subr.bf16.mxu0 0
  %187 = vmatpush1.bf16.msra.mxu0 0
  %188 = vmatprep.mubr.bf16.mxu0 0
  %189 = vmatmul.mubr.bf16.gmra.mrb[0].mxu0 %v129
  %v190 = vpop.f32.mrb[0].mxu0
  %v191 = vadd.f32 0.0, %v190
  %v192 = vpop.f32.mrb[0].mxu0
  %v193 = vpop.f32.mrb[0].mxu0
  %v194 = vadd.f32 0.0, %v193
  %v195 = vpop.f32.mrb[0].mxu0
  %196 = vmatprep.mubr.bf16.mxu0 0
  %197 = vmatmul.mubr.bf16.gmra.mrb[0].mxu0 %v132
  %v198 = vpop.f32.mrb[0].mxu0
  %v199 = vadd.f32 0.0, %v198
  %v200 = vpop.f32.mrb[0].mxu0
  %v201 = vpop.f32.mrb[0].mxu0
  %v202 = vadd.f32 0.0, %v201
  %v203 = vpop.f32.mrb[0].mxu0
  %204 = vmatprep.mubr.bf16.mxu0 0
  %205 = vmatmul.mubr.bf16.gmra.mrb[0].mxu0 %v135
  %v206 = vpop.f32.mrb[0].mxu0
  %v207 = vadd.f32 0.0, %v206
  %v208 = vpop.f32.mrb[0].mxu0
  %v209 = vpop.f32.mrb[0].mxu0
  %v210 = vadd.f32 0.0, %v209
  %v211 = vpop.f32.mrb[0].mxu0
  %212 = vmatprep.mubr.bf16.mxu0 0
  %213 = vmatmul.mubr.bf16.gmra.mrb[0].mxu0 %v138
  %v214 = vpop.f32.mrb[0].mxu0
  %v215 = vadd.f32 0.0, %v214
  %v216 = vpop.f32.mrb[0].mxu0
  %v217 = vpop.f32.mrb[0].mxu0
  %v218 = vadd.f32 0.0, %v217
  %v219 = vpop.f32.mrb[0].mxu0
  %220 = vmatprep.mubr.bf16.mxu0 0
  %221 = vmatmul.mubr.bf16.gmra.mrb[0].mxu0 %v141
  %v222 = vpop.f32.mrb[0].mxu0
  %v223 = vadd.f32 0.0, %v222
  %v224 = vpop.f32.mrb[0].mxu0
  %v225 = vpop.f32.mrb[0].mxu0
  %v226 = vadd.f32 0.0, %v225
  %v227 = vpop.f32.mrb[0].mxu0
  %228 = vmatprep.mubr.bf16.mxu0 0
  %229 = vmatmul.mubr.bf16.gmra.mrb[0].mxu0 %v144
  %v230 = vpop.f32.mrb[0].mxu0
  %v231 = vadd.f32 0.0, %v230
  %v232 = vpop.f32.mrb[0].mxu0
  %v233 = vpop.f32.mrb[0].mxu0
  %v234 = vadd.f32 0.0, %v233
  %v235 = vpop.f32.mrb[0].mxu0
  %236 = vmatprep.mubr.bf16.mxu0 0
  %237 = vmatmul.mubr.bf16.gmra.mrb[0].mxu0 %v147
  %v238 = vpop.f32.mrb[0].mxu0
  %v239 = vadd.f32 0.0, %v238
  %v240 = vpop.f32.mrb[0].mxu0
  %v241 = vpop.f32.mrb[0].mxu0
  %v242 = vadd.f32 0.0, %v241
  %v243 = vpop.f32.mrb[0].mxu0
  %244 = vmatprep.mubr.bf16.mxu0 0
  %245 = vmatmul.mubr.bf16.gmra.mrb[0].mxu0 %v150
  %v246 = vpop.f32.mrb[0].mxu0
  %v247 = vadd.f32 0.0, %v246
  %v248 = vpop.f32.mrb[0].mxu0
  %v249 = vpop.f32.mrb[0].mxu0
  %v250 = vadd.f32 0.0, %v249
  %v251 = vpop.f32.mrb[0].mxu0
  %252 = vdwg.mxu0
  %v263 = vunpack.c.l.b16 %v53
  %v264 = vunpack.c.l.b16 %v54
  %v265 = vunpack.c.l.b16 %v55
  %v266 = vunpack.c.l.b16 %v56
  %v267 = vunpack.c.l.b16 %v57
  %v268 = vunpack.c.l.b16 %v58
  %v269 = vunpack.c.l.b16 %v59
  %v270 = vunpack.c.l.b16 %v60
  %v271 = vunpack.c.l.b16 %v61
  %v272 = vunpack.c.l.b16 %v62
  %v273 = vpack.c.b16 %v264, %v263
  %v274 = vpack.c.b16 %v266, %v265
  %v275 = vpack.c.b16 %v268, %v267
  %v276 = vpack.c.b16 %v270, %v269
  %v277 = vpack.c.b16 %v272, %v271
  %v283 = vsel %vm127, %v45, 0
  %v286 = vsel %vm127, %v46, 0
  %v289 = vsel %vm127, %v47, 0
  %v292 = vsel %vm127, %v48, 0
  %v295 = vsel %vm127, %v49, 0
  %v298 = vsel %vm127, %v50, 0
  %v301 = vsel %vm127, %v51, 0
  %v304 = vsel %vm127, %v52, 0
  %v307 = vsel %vm152, %v277, 0
  %309 = vmatprep.subr.bf16.mxu0 0
  %310 = vmatpush1.bf16.msra.mxu0 %v273
  %311 = vmatprep.subr.bf16.mxu0 0
  %312 = vmatpush1.bf16.msra.mxu0 %v274
  %313 = vmatprep.subr.bf16.mxu0 0
  %314 = vmatpush1.bf16.msra.mxu0 %v275
  %315 = vmatprep.subr.bf16.mxu0 0
  %316 = vmatpush1.bf16.msra.mxu0 %v276
  %317 = vmatprep.subr.bf16.mxu0 0
  %318 = vmatpush1.bf16.msra.mxu0 %v307
  %319 = vmatprep.subr.bf16.mxu0 0
  %320 = vmatpush1.bf16.msra.mxu0 0
  %321 = vmatprep.subr.bf16.mxu0 0
  %322 = vmatpush1.bf16.msra.mxu0 0
  %323 = vmatprep.subr.bf16.mxu0 0
  %324 = vmatpush1.bf16.msra.mxu0 0
  %325 = vmatprep.subr.bf16.mxu0 0
  %326 = vmatpush1.bf16.msra.mxu0 0
  %327 = vmatprep.subr.bf16.mxu0 0
  %328 = vmatpush1.bf16.msra.mxu0 0
  %329 = vmatprep.subr.bf16.mxu0 0
  %330 = vmatpush1.bf16.msra.mxu0 0
  %331 = vmatprep.subr.bf16.mxu0 0
  %332 = vmatpush1.bf16.msra.mxu0 0
  %333 = vmatprep.subr.bf16.mxu0 0
  %334 = vmatpush1.bf16.msra.mxu0 0
  %335 = vmatprep.subr.bf16.mxu0 0
  %336 = vmatpush1.bf16.msra.mxu0 0
  %337 = vmatprep.subr.bf16.mxu0 0
  %338 = vmatpush1.bf16.msra.mxu0 0
  %339 = vmatprep.subr.bf16.mxu0 0
  %340 = vmatpush1.bf16.msra.mxu0 0
  %341 = vmatprep.mubr.bf16.mxu0 0
  %342 = vmatmul.mubr.bf16.gmra.mrb[0].mxu0 %v283
  %v343 = vpop.f32.mrb[0].mxu0
  %v344 = vadd.f32 %v191, %v343
  %v345 = vpop.f32.mrb[0].mxu0
  %v346 = vpop.f32.mrb[0].mxu0
  %v347 = vadd.f32 %v194, %v346
  %v348 = vpop.f32.mrb[0].mxu0
  %349 = vmatprep.mubr.bf16.mxu0 0
  %350 = vmatmul.mubr.bf16.gmra.mrb[0].mxu0 %v286
  %v351 = vpop.f32.mrb[0].mxu0
  %v352 = vadd.f32 %v199, %v351
  %v353 = vpop.f32.mrb[0].mxu0
  %v354 = vpop.f32.mrb[0].mxu0
  %v355 = vadd.f32 %v202, %v354
  %v356 = vpop.f32.mrb[0].mxu0
  %357 = vmatprep.mubr.bf16.mxu0 0
  %358 = vmatmul.mubr.bf16.gmra.mrb[0].mxu0 %v289
  %v359 = vpop.f32.mrb[0].mxu0
  %v360 = vadd.f32 %v207, %v359
  %v361 = vpop.f32.mrb[0].mxu0
  %v362 = vpop.f32.mrb[0].mxu0
  %v363 = vadd.f32 %v210, %v362
  %v364 = vpop.f32.mrb[0].mxu0
  %365 = vmatprep.mubr.bf16.mxu0 0
  %366 = vmatmul.mubr.bf16.gmra.mrb[0].mxu0 %v292
  %v367 = vpop.f32.mrb[0].mxu0
  %v368 = vadd.f32 %v215, %v367
  %v369 = vpop.f32.mrb[0].mxu0
  %v370 = vpop.f32.mrb[0].mxu0
  %v371 = vadd.f32 %v218, %v370
  %v372 = vpop.f32.mrb[0].mxu0
  %373 = vmatprep.mubr.bf16.mxu0 0
  %374 = vmatmul.mubr.bf16.gmra.mrb[0].mxu0 %v295
  %v375 = vpop.f32.mrb[0].mxu0
  %v376 = vadd.f32 %v223, %v375
  %v377 = vpop.f32.mrb[0].mxu0
  %v378 = vpop.f32.mrb[0].mxu0
  %v379 = vadd.f32 %v226, %v378
  %v380 = vpop.f32.mrb[0].mxu0
  %381 = vmatprep.mubr.bf16.mxu0 0
  %382 = vmatmul.mubr.bf16.gmra.mrb[0].mxu0 %v298
  %v383 = vpop.f32.mrb[0].mxu0
  %v384 = vadd.f32 %v231, %v383
  %v385 = vpop.f32.mrb[0].mxu0
  %v386 = vpop.f32.mrb[0].mxu0
  %v387 = vadd.f32 %v234, %v386
  %v388 = vpop.f32.mrb[0].mxu0
  %389 = vmatprep.mubr.bf16.mxu0 0
  %390 = vmatmul.mubr.bf16.gmra.mrb[0].mxu0 %v301
  %v391 = vpop.f32.mrb[0].mxu0
  %v392 = vadd.f32 %v239, %v391
  %v393 = vpop.f32.mrb[0].mxu0
  %v394 = vpop.f32.mrb[0].mxu0
  %v395 = vadd.f32 %v242, %v394
  %v396 = vpop.f32.mrb[0].mxu0
  %397 = vmatprep.mubr.bf16.mxu0 0
  %398 = vmatmul.mubr.bf16.gmra.mrb[0].mxu0 %v304
  %v399 = vpop.f32.mrb[0].mxu0
  %v400 = vadd.f32 %v247, %v399
  %v401 = vpop.f32.mrb[0].mxu0
  %v402 = vpop.f32.mrb[0].mxu0
  %v403 = vadd.f32 %v250, %v402
  %v404 = vpop.f32.mrb[0].mxu0
  %405 = vdwg.mxu0
  %v406 = vld [vmem:[%s0 + $0x9] sm:$0xff]
  %v407 = vld [vmem:[%s0 + $0x11] sm:$0xff]
  %v408 = vld [vmem:[%s0 + $0x19] sm:$0xff]
  %v409 = vld [vmem:[%s0 + $0x21] sm:$0xff]
  %v410 = vld [vmem:[%s0 + $0x29] sm:$0xff]
  %v411 = vld [vmem:[%s0 + $0x31] sm:$0xff]
  %v412 = vld [vmem:[%s0 + $0x39] sm:$0xff]
  %v413 = vld [vmem:[%s0 + $0x41] sm:$0xff]
  %v414 = vld [vmem:[%s0 + $0x49] sm:$0xff]
  %v415 = vld [vmem:[%s0 + $0x51] sm:$0xff]
  %v416 = vld [vmem:[%s0 + $0x59] sm:$0xff]
  %v417 = vld [vmem:[%s0 + $0x61] sm:$0xff]
  %v418 = vld [vmem:[%s0 + $0x69] sm:$0xff]
  %v419 = vld [vmem:[%s0 + $0x71] sm:$0xff]
  %v420 = vld [vmem:[%s0 + $0x79] sm:$0xff]
  %v421 = vld [vmem:[%s0 + $0x81] sm:$0xff]
  %v422 = vpack.c.bf16 %v407, %v406
  %v423 = vpack.c.bf16 %v409, %v408
  %v424 = vpack.c.bf16 %v411, %v410
  %v425 = vpack.c.bf16 %v413, %v412
  %v426 = vpack.c.bf16 %v415, %v414
  %v427 = vpack.c.bf16 %v417, %v416
  %v428 = vpack.c.bf16 %v419, %v418
  %v429 = vpack.c.bf16 %v421, %v420
  %s430 = scalar_lea.vmem %s1, 80
  %v431 = vld [vmem:[%s430] sm:$0xf]
  %v432 = vld [vmem:[%s430 + $0x4] sm:$0xf]
  %v433 = vld [vmem:[%s430 + $0x8] sm:$0xf]
  %v434 = vld [vmem:[%s430 + $0xc] sm:$0xf]
  %v435 = vld [vmem:[%s430 + $0x10] sm:$0xf]
  %v436 = vld [vmem:[%s430 + $0x14] sm:$0xf]
  %v437 = vld [vmem:[%s430 + $0x18] sm:$0xf]
  %v438 = vld [vmem:[%s430 + $0x1c] sm:$0xf]
  %v439 = vld [vmem:[%s430 + $0x20] sm:$0xf]
  %v440 = vld [vmem:[%s430 + $0x24] sm:$0x1]
  %v451 = vunpack.c.l.b16 %v431
  %v452 = vunpack.c.l.b16 %v432
  %v453 = vunpack.c.l.b16 %v433
  %v454 = vunpack.c.l.b16 %v434
  %v455 = vunpack.c.l.b16 %v435
  %v456 = vunpack.c.l.b16 %v436
  %v457 = vunpack.c.l.b16 %v437
  %v458 = vunpack.c.l.b16 %v438
  %v459 = vunpack.c.l.b16 %v439
  %v460 = vunpack.c.l.b16 %v440
  %v461 = vpack.c.b16 %v452, %v451
  %v462 = vpack.c.b16 %v454, %v453
  %v463 = vpack.c.b16 %v456, %v455
  %v464 = vpack.c.b16 %v458, %v457
  %v465 = vpack.c.b16 %v460, %v459
  %v471 = vsel %vm127, %v422, 0
  %v474 = vsel %vm127, %v423, 0
  %v477 = vsel %vm127, %v424, 0
  %v480 = vsel %vm127, %v425, 0
  %v483 = vsel %vm127, %v426, 0
  %v486 = vsel %vm127, %v427, 0
  %v489 = vsel %vm127, %v428, 0
  %v492 = vsel %vm127, %v429, 0
  %v495 = vsel %vm152, %v465, 0
  %497 = vmatprep.subr.bf16.mxu0 0
  %498 = vmatpush1.bf16.msra.mxu0 %v461
  %499 = vmatprep.subr.bf16.mxu0 0
  %500 = vmatpush1.bf16.msra.mxu0 %v462
  %501 = vmatprep.subr.bf16.mxu0 0
  %502 = vmatpush1.bf16.msra.mxu0 %v463
  %503 = vmatprep.subr.bf16.mxu0 0
  %504 = vmatpush1.bf16.msra.mxu0 %v464
  %505 = vmatprep.subr.bf16.mxu0 0
  %506 = vmatpush1.bf16.msra.mxu0 %v495
  %507 = vmatprep.subr.bf16.mxu0 0
  %508 = vmatpush1.bf16.msra.mxu0 0
  %509 = vmatprep.subr.bf16.mxu0 0
  %510 = vmatpush1.bf16.msra.mxu0 0
  %511 = vmatprep.subr.bf16.mxu0 0
  %512 = vmatpush1.bf16.msra.mxu0 0
  %513 = vmatprep.subr.bf16.mxu0 0
  %514 = vmatpush1.bf16.msra.mxu0 0
  %515 = vmatprep.subr.bf16.mxu0 0
  %516 = vmatpush1.bf16.msra.mxu0 0
  %517 = vmatprep.subr.bf16.mxu0 0
  %518 = vmatpush1.bf16.msra.mxu0 0
  %519 = vmatprep.subr.bf16.mxu0 0
  %520 = vmatpush1.bf16.msra.mxu0 0
  %521 = vmatprep.subr.bf16.mxu0 0
  %522 = vmatpush1.bf16.msra.mxu0 0
  %523 = vmatprep.subr.bf16.mxu0 0
  %524 = vmatpush1.bf16.msra.mxu0 0
  %525 = vmatprep.subr.bf16.mxu0 0
  %526 = vmatpush1.bf16.msra.mxu0 0
  %527 = vmatprep.subr.bf16.mxu0 0
  %528 = vmatpush1.bf16.msra.mxu0 0
  %529 = vmatprep.mubr.bf16.mxu0 0
  %530 = vmatmul.mubr.bf16.gmra.mrb[0].mxu0 %v471
  %v531 = vpop.f32.mrb[0].mxu0
  %v532 = vadd.f32 0.0, %v531
  %v533 = vpop.f32.mrb[0].mxu0
  %v534 = vpop.f32.mrb[0].mxu0
  %v535 = vadd.f32 0.0, %v534
  %v536 = vpop.f32.mrb[0].mxu0
  %537 = vmatprep.mubr.bf16.mxu0 0
  %538 = vmatmul.mubr.bf16.gmra.mrb[0].mxu0 %v474
  %v539 = vpop.f32.mrb[0].mxu0
  %v540 = vadd.f32 0.0, %v539
  %v541 = vpop.f32.mrb[0].mxu0
  %v542 = vpop.f32.mrb[0].mxu0
  %v543 = vadd.f32 0.0, %v542
  %v544 = vpop.f32.mrb[0].mxu0
  %545 = vmatprep.mubr.bf16.mxu0 0
  %546 = vmatmul.mubr.bf16.gmra.mrb[0].mxu0 %v477
  %v547 = vpop.f32.mrb[0].mxu0
  %v548 = vadd.f32 0.0, %v547
  %v549 = vpop.f32.mrb[0].mxu0
  %v550 = vpop.f32.mrb[0].mxu0
  %v551 = vadd.f32 0.0, %v550
  %v552 = vpop.f32.mrb[0].mxu0
  %553 = vmatprep.mubr.bf16.mxu0 0
  %554 = vmatmul.mubr.bf16.gmra.mrb[0].mxu0 %v480
  %v555 = vpop.f32.mrb[0].mxu0
  %v556 = vadd.f32 0.0, %v555
  %v557 = vpop.f32.mrb[0].mxu0
  %v558 = vpop.f32.mrb[0].mxu0
  %v559 = vadd.f32 0.0, %v558
  %v560 = vpop.f32.mrb[0].mxu0
  %561 = vmatprep.mubr.bf16.mxu0 0
  %562 = vmatmul.mubr.bf16.gmra.mrb[0].mxu0 %v483
  %v563 = vpop.f32.mrb[0].mxu0
  %v564 = vadd.f32 0.0, %v563
  %v565 = vpop.f32.mrb[0].mxu0
  %v566 = vpop.f32.mrb[0].mxu0
  %v567 = vadd.f32 0.0, %v566
  %v568 = vpop.f32.mrb[0].mxu0
  %569 = vmatprep.mubr.bf16.mxu0 0
  %570 = vmatmul.mubr.bf16.gmra.mrb[0].mxu0 %v486
  %v571 = vpop.f32.mrb[0].mxu0
  %v572 = vadd.f32 0.0, %v571
  %v573 = vpop.f32.mrb[0].mxu0
  %v574 = vpop.f32.mrb[0].mxu0
  %v575 = vadd.f32 0.0, %v574
  %v576 = vpop.f32.mrb[0].mxu0
  %577 = vmatprep.mubr.bf16.mxu0 0
  %578 = vmatmul.mubr.bf16.gmra.mrb[0].mxu0 %v489
  %v579 = vpop.f32.mrb[0].mxu0
  %v580 = vadd.f32 0.0, %v579
  %v581 = vpop.f32.mrb[0].mxu0
  %v582 = vpop.f32.mrb[0].mxu0
  %v583 = vadd.f32 0.0, %v582
  %v584 = vpop.f32.mrb[0].mxu0
  %585 = vmatprep.mubr.bf16.mxu0 0
  %586 = vmatmul.mubr.bf16.gmra.mrb[0].mxu0 %v492
  %v587 = vpop.f32.mrb[0].mxu0
  %v588 = vadd.f32 0.0, %v587
  %v589 = vpop.f32.mrb[0].mxu0
  %v590 = vpop.f32.mrb[0].mxu0
  %v591 = vadd.f32 0.0, %v590
  %v592 = vpop.f32.mrb[0].mxu0
  %593 = vdwg.mxu0
  %v594 = vadd.f32 %v344, %v532
  %v595 = vadd.f32 %v347, %v535
  %v596 = vadd.f32 %v352, %v540
  %v597 = vadd.f32 %v355, %v543
  %v598 = vadd.f32 %v360, %v548
  %v599 = vadd.f32 %v363, %v551
  %v600 = vadd.f32 %v368, %v556
  %v601 = vadd.f32 %v371, %v559
  %v602 = vadd.f32 %v376, %v564
  %v603 = vadd.f32 %v379, %v567
  %v604 = vadd.f32 %v384, %v572
  %v605 = vadd.f32 %v387, %v575
  %v606 = vadd.f32 %v392, %v580
  %v607 = vadd.f32 %v395, %v583
  %v608 = vadd.f32 %v400, %v588
  %v609 = vadd.f32 %v403, %v591
  %v610 = vld [vmem:[%s0 + $0xf] sm:$0xff]
  %v611 = vld [vmem:[%s0 + $0x17] sm:$0xff]
  %v612 = vld [vmem:[%s0 + $0x1f] sm:$0xff]
  %v613 = vld [vmem:[%s0 + $0x27] sm:$0xff]
  %v614 = vld [vmem:[%s0 + $0x2f] sm:$0xff]
  %v615 = vld [vmem:[%s0 + $0x37] sm:$0xff]
  %v616 = vld [vmem:[%s0 + $0x3f] sm:$0xff]
  %v617 = vld [vmem:[%s0 + $0x47] sm:$0xff]
  %v618 = vld [vmem:[%s0 + $0x4f] sm:$0xff]
  %v619 = vld [vmem:[%s0 + $0x57] sm:$0xff]
  %v620 = vld [vmem:[%s0 + $0x5f] sm:$0xff]
  %v621 = vld [vmem:[%s0 + $0x67] sm:$0xff]
  %v622 = vld [vmem:[%s0 + $0x6f] sm:$0xff]
  %v623 = vld [vmem:[%s0 + $0x77] sm:$0xff]
  %v624 = vld [vmem:[%s0 + $0x7f] sm:$0xff]
  %v625 = vld [vmem:[%s0 + $0x87] sm:$0xff]
  %v626 = vpack.c.bf16 %v611, %v610
  %v627 = vpack.c.bf16 %v613, %v612
  %v628 = vpack.c.bf16 %v615, %v614
  %v629 = vpack.c.bf16 %v617, %v616
  %v630 = vpack.c.bf16 %v619, %v618
  %v631 = vpack.c.bf16 %v621, %v620
  %v632 = vpack.c.bf16 %v623, %v622
  %v633 = vpack.c.bf16 %v625, %v624
  %s634 = scalar_lea.vmem %s1, 120
  %v635 = vld [vmem:[%s634] sm:$0xf]
  %v636 = vld [vmem:[%s634 + $0x4] sm:$0xf]
  %v637 = vld [vmem:[%s634 + $0x8] sm:$0xf]
  %v638 = vld [vmem:[%s634 + $0xc] sm:$0xf]
  %v639 = vld [vmem:[%s634 + $0x10] sm:$0xf]
  %v640 = vld [vmem:[%s634 + $0x14] sm:$0xf]
  %v641 = vld [vmem:[%s634 + $0x18] sm:$0xf]
  %v642 = vld [vmem:[%s634 + $0x1c] sm:$0xf]
  %v643 = vld [vmem:[%s634 + $0x20] sm:$0xf]
  %v644 = vld [vmem:[%s634 + $0x24] sm:$0x1]
  %v655 = vunpack.c.l.b16 %v635
  %v656 = vunpack.c.l.b16 %v636
  %v657 = vunpack.c.l.b16 %v637
  %v658 = vunpack.c.l.b16 %v638
  %v659 = vunpack.c.l.b16 %v639
  %v660 = vunpack.c.l.b16 %v640
  %v661 = vunpack.c.l.b16 %v641
  %v662 = vunpack.c.l.b16 %v642
  %v663 = vunpack.c.l.b16 %v643
  %v664 = vunpack.c.l.b16 %v644
  %v665 = vpack.c.b16 %v656, %v655
  %v666 = vpack.c.b16 %v658, %v657
  %v667 = vpack.c.b16 %v660, %v659
  %v668 = vpack.c.b16 %v662, %v661
  %v669 = vpack.c.b16 %v664, %v663
  %v675 = vsel %vm127, %v626, 0
  %v678 = vsel %vm127, %v627, 0
  %v681 = vsel %vm127, %v628, 0
  %v684 = vsel %vm127, %v629, 0
  %v687 = vsel %vm127, %v630, 0
  %v690 = vsel %vm127, %v631, 0
  %v693 = vsel %vm127, %v632, 0
  %v696 = vsel %vm127, %v633, 0
  %v699 = vsel %vm152, %v669, 0
  %701 = vmatprep.subr.bf16.mxu0 0
  %702 = vmatpush1.bf16.msra.mxu0 %v665
  %703 = vmatprep.subr.bf16.mxu0 0
  %704 = vmatpush1.bf16.msra.mxu0 %v666
  %705 = vmatprep.subr.bf16.mxu0 0
  %706 = vmatpush1.bf16.msra.mxu0 %v667
  %707 = vmatprep.subr.bf16.mxu0 0
  %708 = vmatpush1.bf16.msra.mxu0 %v668
  %709 = vmatprep.subr.bf16.mxu0 0
  %710 = vmatpush1.bf16.msra.mxu0 %v699
  %711 = vmatprep.subr.bf16.mxu0 0
  %712 = vmatpush1.bf16.msra.mxu0 0
  %713 = vmatprep.subr.bf16.mxu0 0
  %714 = vmatpush1.bf16.msra.mxu0 0
  %715 = vmatprep.subr.bf16.mxu0 0
  %716 = vmatpush1.bf16.msra.mxu0 0
  %717 = vmatprep.subr.bf16.mxu0 0
  %718 = vmatpush1.bf16.msra.mxu0 0
  %719 = vmatprep.subr.bf16.mxu0 0
  %720 = vmatpush1.bf16.msra.mxu0 0
  %721 = vmatprep.subr.bf16.mxu0 0
  %722 = vmatpush1.bf16.msra.mxu0 0
  %723 = vmatprep.subr.bf16.mxu0 0
  %724 = vmatpush1.bf16.msra.mxu0 0
  %725 = vmatprep.subr.bf16.mxu0 0
  %726 = vmatpush1.bf16.msra.mxu0 0
  %727 = vmatprep.subr.bf16.mxu0 0
  %728 = vmatpush1.bf16.msra.mxu0 0
  %729 = vmatprep.subr.bf16.mxu0 0
  %730 = vmatpush1.bf16.msra.mxu0 0
  %731 = vmatprep.subr.bf16.mxu0 0
  %732 = vmatpush1.bf16.msra.mxu0 0
  %733 = vmatprep.mubr.bf16.mxu0 0
  %734 = vmatmul.mubr.bf16.gmra.mrb[0].mxu0 %v675
  %v735 = vpop.f32.mrb[0].mxu0
  %v736 = vadd.f32 0.0, %v735
  %v737 = vpop.f32.mrb[0].mxu0
  %v738 = vpop.f32.mrb[0].mxu0
  %v739 = vadd.f32 0.0, %v738
  %v740 = vpop.f32.mrb[0].mxu0
  %741 = vmatprep.mubr.bf16.mxu0 0
  %742 = vmatmul.mubr.bf16.gmra.mrb[0].mxu0 %v678
  %v743 = vpop.f32.mrb[0].mxu0
  %v744 = vadd.f32 0.0, %v743
  %v745 = vpop.f32.mrb[0].mxu0
  %v746 = vpop.f32.mrb[0].mxu0
  %v747 = vadd.f32 0.0, %v746
  %v748 = vpop.f32.mrb[0].mxu0
  %749 = vmatprep.mubr.bf16.mxu0 0
  %750 = vmatmul.mubr.bf16.gmra.mrb[0].mxu0 %v681
  %v751 = vpop.f32.mrb[0].mxu0
  %v752 = vadd.f32 0.0, %v751
  %v753 = vpop.f32.mrb[0].mxu0
  %v754 = vpop.f32.mrb[0].mxu0
  %v755 = vadd.f32 0.0, %v754
  %v756 = vpop.f32.mrb[0].mxu0
  %757 = vmatprep.mubr.bf16.mxu0 0
  %758 = vmatmul.mubr.bf16.gmra.mrb[0].mxu0 %v684
  %v759 = vpop.f32.mrb[0].mxu0
  %v760 = vadd.f32 0.0, %v759
  %v761 = vpop.f32.mrb[0].mxu0
  %v762 = vpop.f32.mrb[0].mxu0
  %v763 = vadd.f32 0.0, %v762
  %v764 = vpop.f32.mrb[0].mxu0
  %765 = vmatprep.mubr.bf16.mxu0 0
  %766 = vmatmul.mubr.bf16.gmra.mrb[0].mxu0 %v687
  %v767 = vpop.f32.mrb[0].mxu0
  %v768 = vadd.f32 0.0, %v767
  %v769 = vpop.f32.mrb[0].mxu0
  %v770 = vpop.f32.mrb[0].mxu0
  %v771 = vadd.f32 0.0, %v770
  %v772 = vpop.f32.mrb[0].mxu0
  %773 = vmatprep.mubr.bf16.mxu0 0
  %774 = vmatmul.mubr.bf16.gmra.mrb[0].mxu0 %v690
  %v775 = vpop.f32.mrb[0].mxu0
  %v776 = vadd.f32 0.0, %v775
  %v777 = vpop.f32.mrb[0].mxu0
  %v778 = vpop.f32.mrb[0].mxu0
  %v779 = vadd.f32 0.0, %v778
  %v780 = vpop.f32.mrb[0].mxu0
  %781 = vmatprep.mubr.bf16.mxu0 0
  %782 = vmatmul.mubr.bf16.gmra.mrb[0].mxu0 %v693
  %v783 = vpop.f32.mrb[0].mxu0
  %v784 = vadd.f32 0.0, %v783
  %v785 = vpop.f32.mrb[0].mxu0
  %v786 = vpop.f32.mrb[0].mxu0
  %v787 = vadd.f32 0.0, %v786
  %v788 = vpop.f32.mrb[0].mxu0
  %789 = vmatprep.mubr.bf16.mxu0 0
  %790 = vmatmul.mubr.bf16.gmra.mrb[0].mxu0 %v696
  %v791 = vpop.f32.mrb[0].mxu0
  %v792 = vadd.f32 0.0, %v791
  %v793 = vpop.f32.mrb[0].mxu0
  %v794 = vpop.f32.mrb[0].mxu0
  %v795 = vadd.f32 0.0, %v794
  %v796 = vpop.f32.mrb[0].mxu0
  %797 = vdwg.mxu0
  %v798 = vadd.f32 %v594, %v736
  %v799 = vadd.f32 %v595, %v739
  %v800 = vadd.f32 %v596, %v744
  %v801 = vadd.f32 %v597, %v747
  %v802 = vadd.f32 %v598, %v752
  %v803 = vadd.f32 %v599, %v755
  %v804 = vadd.f32 %v600, %v760
  %v805 = vadd.f32 %v601, %v763
  %v806 = vadd.f32 %v602, %v768
  %v807 = vadd.f32 %v603, %v771
  %v808 = vadd.f32 %v604, %v776
  %v809 = vadd.f32 %v605, %v779
  %v810 = vadd.f32 %v606, %v784
  %v811 = vadd.f32 %v607, %v787
  %v812 = vadd.f32 %v608, %v792
  %v813 = vadd.f32 %v609, %v795
  %v814 = vld [vmem:[%s0 + $0x10] sm:$0xff]
  %v815 = vld [vmem:[%s0 + $0x18] sm:$0xff]
  %v816 = vld [vmem:[%s0 + $0x20] sm:$0xff]
  %v817 = vld [vmem:[%s0 + $0x28] sm:$0xff]
  %v818 = vld [vmem:[%s0 + $0x30] sm:$0xff]
  %v819 = vld [vmem:[%s0 + $0x38] sm:$0xff]
  %v820 = vld [vmem:[%s0 + $0x40] sm:$0xff]
  %v821 = vld [vmem:[%s0 + $0x48] sm:$0xff]
  %v822 = vld [vmem:[%s0 + $0x50] sm:$0xff]
  %v823 = vld [vmem:[%s0 + $0x58] sm:$0xff]
  %v824 = vld [vmem:[%s0 + $0x60] sm:$0xff]
  %v825 = vld [vmem:[%s0 + $0x68] sm:$0xff]
  %v826 = vld [vmem:[%s0 + $0x70] sm:$0xff]
  %v827 = vld [vmem:[%s0 + $0x78] sm:$0xff]
  %v828 = vld [vmem:[%s0 + $0x80] sm:$0xff]
  %v829 = vld [vmem:[%s0 + $0x88] sm:$0xff]
  %v830 = vpack.c.bf16 %v815, %v814
  %v831 = vpack.c.bf16 %v817, %v816
  %v832 = vpack.c.bf16 %v819, %v818
  %v833 = vpack.c.bf16 %v821, %v820
  %v834 = vpack.c.bf16 %v823, %v822
  %v835 = vpack.c.bf16 %v825, %v824
  %v836 = vpack.c.bf16 %v827, %v826
  %v837 = vpack.c.bf16 %v829, %v828
  %s838 = scalar_lea.vmem %s1, 160
  %v839 = vld [vmem:[%s838] sm:$0xf]
  %v840 = vld [vmem:[%s838 + $0x4] sm:$0xf]
  %v841 = vld [vmem:[%s838 + $0x8] sm:$0xf]
  %v842 = vld [vmem:[%s838 + $0xc] sm:$0xf]
  %v843 = vld [vmem:[%s838 + $0x10] sm:$0xf]
  %v844 = vld [vmem:[%s838 + $0x14] sm:$0xf]
  %v845 = vld [vmem:[%s838 + $0x18] sm:$0xf]
  %v846 = vld [vmem:[%s838 + $0x1c] sm:$0xf]
  %v847 = vld [vmem:[%s838 + $0x20] sm:$0xf]
  %v848 = vld [vmem:[%s838 + $0x24] sm:$0x1]
  %v859 = vunpack.c.l.b16 %v839
  %v860 = vunpack.c.l.b16 %v840
  %v861 = vunpack.c.l.b16 %v841
  %v862 = vunpack.c.l.b16 %v842
  %v863 = vunpack.c.l.b16 %v843
  %v864 = vunpack.c.l.b16 %v844
  %v865 = vunpack.c.l.b16 %v845
  %v866 = vunpack.c.l.b16 %v846
  %v867 = vunpack.c.l.b16 %v847
  %v868 = vunpack.c.l.b16 %v848
  %v869 = vpack.c.b16 %v860, %v859
  %v870 = vpack.c.b16 %v862, %v861
  %v871 = vpack.c.b16 %v864, %v863
  %v872 = vpack.c.b16 %v866, %v865
  %v873 = vpack.c.b16 %v868, %v867
  %v879 = vsel %vm127, %v830, 0
  %v882 = vsel %vm127, %v831, 0
  %v885 = vsel %vm127, %v832, 0
  %v888 = vsel %vm127, %v833, 0
  %v891 = vsel %vm127, %v834, 0
  %v894 = vsel %vm127, %v835, 0
  %v897 = vsel %vm127, %v836, 0
  %v900 = vsel %vm127, %v837, 0
  %v903 = vsel %vm152, %v873, 0
  %905 = vmatprep.subr.bf16.mxu0 0
  %906 = vmatpush1.bf16.msra.mxu0 %v869
  %907 = vmatprep.subr.bf16.mxu0 0
  %908 = vmatpush1.bf16.msra.mxu0 %v870
  %909 = vmatprep.subr.bf16.mxu0 0
  %910 = vmatpush1.bf16.msra.mxu0 %v871
  %911 = vmatprep.subr.bf16.mxu0 0
  %912 = vmatpush1.bf16.msra.mxu0 %v872
  %913 = vmatprep.subr.bf16.mxu0 0
  %914 = vmatpush1.bf16.msra.mxu0 %v903
  %915 = vmatprep.subr.bf16.mxu0 0
  %916 = vmatpush1.bf16.msra.mxu0 0
  %917 = vmatprep.subr.bf16.mxu0 0
  %918 = vmatpush1.bf16.msra.mxu0 0
  %919 = vmatprep.subr.bf16.mxu0 0
  %920 = vmatpush1.bf16.msra.mxu0 0
  %921 = vmatprep.subr.bf16.mxu0 0
  %922 = vmatpush1.bf16.msra.mxu0 0
  %923 = vmatprep.subr.bf16.mxu0 0
  %924 = vmatpush1.bf16.msra.mxu0 0
  %925 = vmatprep.subr.bf16.mxu0 0
  %926 = vmatpush1.bf16.msra.mxu0 0
  %927 = vmatprep.subr.bf16.mxu0 0
  %928 = vmatpush1.bf16.msra.mxu0 0
  %929 = vmatprep.subr.bf16.mxu0 0
  %930 = vmatpush1.bf16.msra.mxu0 0
  %931 = vmatprep.subr.bf16.mxu0 0
  %932 = vmatpush1.bf16.msra.mxu0 0
  %933 = vmatprep.subr.bf16.mxu0 0
  %934 = vmatpush1.bf16.msra.mxu0 0
  %935 = vmatprep.subr.bf16.mxu0 0
  %936 = vmatpush1.bf16.msra.mxu0 0
  %937 = vmatprep.mubr.bf16.mxu0 0
  %938 = vmatmul.mubr.bf16.gmra.mrb[0].mxu0 %v879
  %v939 = vpop.f32.mrb[0].mxu0
  %v940 = vadd.f32 0.0, %v939
  %v941 = vpop.f32.mrb[0].mxu0
  %v942 = vpop.f32.mrb[0].mxu0
  %v943 = vadd.f32 0.0, %v942
  %v944 = vpop.f32.mrb[0].mxu0
  %945 = vmatprep.mubr.bf16.mxu0 0
  %946 = vmatmul.mubr.bf16.gmra.mrb[0].mxu0 %v882
  %v947 = vpop.f32.mrb[0].mxu0
  %v948 = vadd.f32 0.0, %v947
  %v949 = vpop.f32.mrb[0].mxu0
  %v950 = vpop.f32.mrb[0].mxu0
  %v951 = vadd.f32 0.0, %v950
  %v952 = vpop.f32.mrb[0].mxu0
  %953 = vmatprep.mubr.bf16.mxu0 0
  %954 = vmatmul.mubr.bf16.gmra.mrb[0].mxu0 %v885
  %v955 = vpop.f32.mrb[0].mxu0
  %v956 = vadd.f32 0.0, %v955
  %v957 = vpop.f32.mrb[0].mxu0
  %v958 = vpop.f32.mrb[0].mxu0
  %v959 = vadd.f32 0.0, %v958
  %v960 = vpop.f32.mrb[0].mxu0
  %961 = vmatprep.mubr.bf16.mxu0 0
  %962 = vmatmul.mubr.bf16.gmra.mrb[0].mxu0 %v888
  %v963 = vpop.f32.mrb[0].mxu0
  %v964 = vadd.f32 0.0, %v963
  %v965 = vpop.f32.mrb[0].mxu0
  %v966 = vpop.f32.mrb[0].mxu0
  %v967 = vadd.f32 0.0, %v966
  %v968 = vpop.f32.mrb[0].mxu0
  %969 = vmatprep.mubr.bf16.mxu0 0
  %970 = vmatmul.mubr.bf16.gmra.mrb[0].mxu0 %v891
  %v971 = vpop.f32.mrb[0].mxu0
  %v972 = vadd.f32 0.0, %v971
  %v973 = vpop.f32.mrb[0].mxu0
  %v974 = vpop.f32.mrb[0].mxu0
  %v975 = vadd.f32 0.0, %v974
  %v976 = vpop.f32.mrb[0].mxu0
  %977 = vmatprep.mubr.bf16.mxu0 0
  %978 = vmatmul.mubr.bf16.gmra.mrb[0].mxu0 %v894
  %v979 = vpop.f32.mrb[0].mxu0
  %v980 = vadd.f32 0.0, %v979
  %v981 = vpop.f32.mrb[0].mxu0
  %v982 = vpop.f32.mrb[0].mxu0
  %v983 = vadd.f32 0.0, %v982
  %v984 = vpop.f32.mrb[0].mxu0
  %985 = vmatprep.mubr.bf16.mxu0 0
  %986 = vmatmul.mubr.bf16.gmra.mrb[0].mxu0 %v897
  %v987 = vpop.f32.mrb[0].mxu0
  %v988 = vadd.f32 0.0, %v987
  %v989 = vpop.f32.mrb[0].mxu0
  %v990 = vpop.f32.mrb[0].mxu0
  %v991 = vadd.f32 0.0, %v990
  %v992 = vpop.f32.mrb[0].mxu0
  %993 = vmatprep.mubr.bf16.mxu0 0
  %994 = vmatmul.mubr.bf16.gmra.mrb[0].mxu0 %v900
  %v995 = vpop.f32.mrb[0].mxu0
  %v996 = vadd.f32 0.0, %v995
  %v997 = vpop.f32.mrb[0].mxu0
  %v998 = vpop.f32.mrb[0].mxu0
  %v999 = vadd.f32 0.0, %v998
  %v1000 = vpop.f32.mrb[0].mxu0
  %1001 = vdwg.mxu0
  %v1002 = vadd.f32 %v798, %v940
  %v1003 = vadd.f32 %v799, %v943
  %v1004 = vadd.f32 %v800, %v948
  %v1005 = vadd.f32 %v801, %v951
  %v1006 = vadd.f32 %v802, %v956
  %v1007 = vadd.f32 %v803, %v959
  %v1008 = vadd.f32 %v804, %v964
  %v1009 = vadd.f32 %v805, %v967
  %v1010 = vadd.f32 %v806, %v972
  %v1011 = vadd.f32 %v807, %v975
  %v1012 = vadd.f32 %v808, %v980
  %v1013 = vadd.f32 %v809, %v983
  %v1014 = vadd.f32 %v810, %v988
  %v1015 = vadd.f32 %v811, %v991
  %v1016 = vadd.f32 %v812, %v996
  %v1017 = vadd.f32 %v813, %v999
  %v1018 = vld [vmem:[%s0 + $0x11] sm:$0xff]
  %v1019 = vld [vmem:[%s0 + $0x19] sm:$0xff]
  %v1020 = vld [vmem:[%s0 + $0x21] sm:$0xff]
  %v1021 = vld [vmem:[%s0 + $0x29] sm:$0xff]
  %v1022 = vld [vmem:[%s0 + $0x31] sm:$0xff]
  %v1023 = vld [vmem:[%s0 + $0x39] sm:$0xff]
  %v1024 = vld [vmem:[%s0 + $0x41] sm:$0xff]
  %v1025 = vld [vmem:[%s0 + $0x49] sm:$0xff]
  %v1026 = vld [vmem:[%s0 + $0x51] sm:$0xff]
  %v1027 = vld [vmem:[%s0 + $0x59] sm:$0xff]
  %v1028 = vld [vmem:[%s0 + $0x61] sm:$0xff]
  %v1029 = vld [vmem:[%s0 + $0x69] sm:$0xff]
  %v1030 = vld [vmem:[%s0 + $0x71] sm:$0xff]
  %v1031 = vld [vmem:[%s0 + $0x79] sm:$0xff]
  %v1032 = vld [vmem:[%s0 + $0x81] sm:$0xff]
  %v1033 = vld [vmem:[%s0 + $0x89] sm:$0xff]
  %v1034 = vpack.c.bf16 %v1019, %v1018
  %v1035 = vpack.c.bf16 %v1021, %v1020
  %v1036 = vpack.c.bf16 %v1023, %v1022
  %v1037 = vpack.c.bf16 %v1025, %v1024
  %v1038 = vpack.c.bf16 %v1027, %v1026
  %v1039 = vpack.c.bf16 %v1029, %v1028
  %v1040 = vpack.c.bf16 %v1031, %v1030
  %v1041 = vpack.c.bf16 %v1033, %v1032
  %s1042 = scalar_lea.vmem %s1, 200
  %v1043 = vld [vmem:[%s1042] sm:$0xf]
  %v1044 = vld [vmem:[%s1042 + $0x4] sm:$0xf]
  %v1045 = vld [vmem:[%s1042 + $0x8] sm:$0xf]
  %v1046 = vld [vmem:[%s1042 + $0xc] sm:$0xf]
  %v1047 = vld [vmem:[%s1042 + $0x10] sm:$0xf]
  %v1048 = vld [vmem:[%s1042 + $0x14] sm:$0xf]
  %v1049 = vld [vmem:[%s1042 + $0x18] sm:$0xf]
  %v1050 = vld [vmem:[%s1042 + $0x1c] sm:$0xf]
  %v1051 = vld [vmem:[%s1042 + $0x20] sm:$0xf]
  %v1052 = vld [vmem:[%s1042 + $0x24] sm:$0x1]
  %v1063 = vunpack.c.l.b16 %v1043
  %v1064 = vunpack.c.l.b16 %v1044
  %v1065 = vunpack.c.l.b16 %v1045
  %v1066 = vunpack.c.l.b16 %v1046
  %v1067 = vunpack.c.l.b16 %v1047
  %v1068 = vunpack.c.l.b16 %v1048
  %v1069 = vunpack.c.l.b16 %v1049
  %v1070 = vunpack.c.l.b16 %v1050
  %v1071 = vunpack.c.l.b16 %v1051
  %v1072 = vunpack.c.l.b16 %v1052
  %v1073 = vpack.c.b16 %v1064, %v1063
  %v1074 = vpack.c.b16 %v1066, %v1065
  %v1075 = vpack.c.b16 %v1068, %v1067
  %v1076 = vpack.c.b16 %v1070, %v1069
  %v1077 = vpack.c.b16 %v1072, %v1071
  %v1083 = vsel %vm127, %v1034, 0
  %v1086 = vsel %vm127, %v1035, 0
  %v1089 = vsel %vm127, %v1036, 0
  %v1092 = vsel %vm127, %v1037, 0
  %v1095 = vsel %vm127, %v1038, 0
  %v1098 = vsel %vm127, %v1039, 0
  %v1101 = vsel %vm127, %v1040, 0
  %v1104 = vsel %vm127, %v1041, 0
  %v1107 = vsel %vm152, %v1077, 0
  %1109 = vmatprep.subr.bf16.mxu0 0
  %1110 = vmatpush1.bf16.msra.mxu0 %v1073
  %1111 = vmatprep.subr.bf16.mxu0 0
  %1112 = vmatpush1.bf16.msra.mxu0 %v1074
  %1113 = vmatprep.subr.bf16.mxu0 0
  %1114 = vmatpush1.bf16.msra.mxu0 %v1075
  %1115 = vmatprep.subr.bf16.mxu0 0
  %1116 = vmatpush1.bf16.msra.mxu0 %v1076
  %1117 = vmatprep.subr.bf16.mxu0 0
  %1118 = vmatpush1.bf16.msra.mxu0 %v1107
  %1119 = vmatprep.subr.bf16.mxu0 0
  %1120 = vmatpush1.bf16.msra.mxu0 0
  %1121 = vmatprep.subr.bf16.mxu0 0
  %1122 = vmatpush1.bf16.msra.mxu0 0
  %1123 = vmatprep.subr.bf16.mxu0 0
  %1124 = vmatpush1.bf16.msra.mxu0 0
  %1125 = vmatprep.subr.bf16.mxu0 0
  %1126 = vmatpush1.bf16.msra.mxu0 0
  %1127 = vmatprep.subr.bf16.mxu0 0
  %1128 = vmatpush1.bf16.msra.mxu0 0
  %1129 = vmatprep.subr.bf16.mxu0 0
  %1130 = vmatpush1.bf16.msra.mxu0 0
  %1131 = vmatprep.subr.bf16.mxu0 0
  %1132 = vmatpush1.bf16.msra.mxu0 0
  %1133 = vmatprep.subr.bf16.mxu0 0
  %1134 = vmatpush1.bf16.msra.mxu0 0
  %1135 = vmatprep.subr.bf16.mxu0 0
  %1136 = vmatpush1.bf16.msra.mxu0 0
  %1137 = vmatprep.subr.bf16.mxu0 0
  %1138 = vmatpush1.bf16.msra.mxu0 0
  %1139 = vmatprep.subr.bf16.mxu0 0
  %1140 = vmatpush1.bf16.msra.mxu0 0
  %1141 = vmatprep.mubr.bf16.mxu0 0
  %1142 = vmatmul.mubr.bf16.gmra.mrb[0].mxu0 %v1083
  %v1143 = vpop.f32.mrb[0].mxu0
  %v1144 = vadd.f32 0.0, %v1143
  %v1145 = vpop.f32.mrb[0].mxu0
  %v1146 = vpop.f32.mrb[0].mxu0
  %v1147 = vadd.f32 0.0, %v1146
  %v1148 = vpop.f32.mrb[0].mxu0
  %1149 = vmatprep.mubr.bf16.mxu0 0
  %1150 = vmatmul.mubr.bf16.gmra.mrb[0].mxu0 %v1086
  %v1151 = vpop.f32.mrb[0].mxu0
  %v1152 = vadd.f32 0.0, %v1151
  %v1153 = vpop.f32.mrb[0].mxu0
  %v1154 = vpop.f32.mrb[0].mxu0
  %v1155 = vadd.f32 0.0, %v1154
  %v1156 = vpop.f32.mrb[0].mxu0
  %1157 = vmatprep.mubr.bf16.mxu0 0
  %1158 = vmatmul.mubr.bf16.gmra.mrb[0].mxu0 %v1089
  %v1159 = vpop.f32.mrb[0].mxu0
  %v1160 = vadd.f32 0.0, %v1159
  %v1161 = vpop.f32.mrb[0].mxu0
  %v1162 = vpop.f32.mrb[0].mxu0
  %v1163 = vadd.f32 0.0, %v1162
  %v1164 = vpop.f32.mrb[0].mxu0
  %1165 = vmatprep.mubr.bf16.mxu0 0
  %1166 = vmatmul.mubr.bf16.gmra.mrb[0].mxu0 %v1092
  %v1167 = vpop.f32.mrb[0].mxu0
  %v1168 = vadd.f32 0.0, %v1167
  %v1169 = vpop.f32.mrb[0].mxu0
  %v1170 = vpop.f32.mrb[0].mxu0
  %v1171 = vadd.f32 0.0, %v1170
  %v1172 = vpop.f32.mrb[0].mxu0
  %1173 = vmatprep.mubr.bf16.mxu0 0
  %1174 = vmatmul.mubr.bf16.gmra.mrb[0].mxu0 %v1095
  %v1175 = vpop.f32.mrb[0].mxu0
  %v1176 = vadd.f32 0.0, %v1175
  %v1177 = vpop.f32.mrb[0].mxu0
  %v1178 = vpop.f32.mrb[0].mxu0
  %v1179 = vadd.f32 0.0, %v1178
  %v1180 = vpop.f32.mrb[0].mxu0
  %1181 = vmatprep.mubr.bf16.mxu0 0
  %1182 = vmatmul.mubr.bf16.gmra.mrb[0].mxu0 %v1098
  %v1183 = vpop.f32.mrb[0].mxu0
  %v1184 = vadd.f32 0.0, %v1183
  %v1185 = vpop.f32.mrb[0].mxu0
  %v1186 = vpop.f32.mrb[0].mxu0
  %v1187 = vadd.f32 0.0, %v1186
  %v1188 = vpop.f32.mrb[0].mxu0
  %1189 = vmatprep.mubr.bf16.mxu0 0
  %1190 = vmatmul.mubr.bf16.gmra.mrb[0].mxu0 %v1101
  %v1191 = vpop.f32.mrb[0].mxu0
  %v1192 = vadd.f32 0.0, %v1191
  %v1193 = vpop.f32.mrb[0].mxu0
  %v1194 = vpop.f32.mrb[0].mxu0
  %v1195 = vadd.f32 0.0, %v1194
  %v1196 = vpop.f32.mrb[0].mxu0
  %1197 = vmatprep.mubr.bf16.mxu0 0
  %1198 = vmatmul.mubr.bf16.gmra.mrb[0].mxu0 %v1104
  %v1199 = vpop.f32.mrb[0].mxu0
  %v1200 = vadd.f32 0.0, %v1199
  %v1201 = vpop.f32.mrb[0].mxu0
  %v1202 = vpop.f32.mrb[0].mxu0
  %v1203 = vadd.f32 0.0, %v1202
  %v1204 = vpop.f32.mrb[0].mxu0
  %1205 = vdwg.mxu0
  %v1206 = vadd.f32 %v1002, %v1144
  %v1207 = vadd.f32 %v1003, %v1147
  %v1208 = vadd.f32 %v1004, %v1152
  %v1209 = vadd.f32 %v1005, %v1155
  %v1210 = vadd.f32 %v1006, %v1160
  %v1211 = vadd.f32 %v1007, %v1163
  %v1212 = vadd.f32 %v1008, %v1168
  %v1213 = vadd.f32 %v1009, %v1171
  %v1214 = vadd.f32 %v1010, %v1176
  %v1215 = vadd.f32 %v1011, %v1179
  %v1216 = vadd.f32 %v1012, %v1184
  %v1217 = vadd.f32 %v1013, %v1187
  %v1218 = vadd.f32 %v1014, %v1192
  %v1219 = vadd.f32 %v1015, %v1195
  %v1220 = vadd.f32 %v1016, %v1200
  %v1221 = vadd.f32 %v1017, %v1203
  %v1222 = vld [vmem:[%s0 + $0x17] sm:$0xff]
  %v1223 = vld [vmem:[%s0 + $0x1f] sm:$0xff]
  %v1224 = vld [vmem:[%s0 + $0x27] sm:$0xff]
  %v1225 = vld [vmem:[%s0 + $0x2f] sm:$0xff]
  %v1226 = vld [vmem:[%s0 + $0x37] sm:$0xff]
  %v1227 = vld [vmem:[%s0 + $0x3f] sm:$0xff]
  %v1228 = vld [vmem:[%s0 + $0x47] sm:$0xff]
  %v1229 = vld [vmem:[%s0 + $0x4f] sm:$0xff]
  %v1230 = vld [vmem:[%s0 + $0x57] sm:$0xff]
  %v1231 = vld [vmem:[%s0 + $0x5f] sm:$0xff]
  %v1232 = vld [vmem:[%s0 + $0x67] sm:$0xff]
  %v1233 = vld [vmem:[%s0 + $0x6f] sm:$0xff]
  %v1234 = vld [vmem:[%s0 + $0x77] sm:$0xff]
  %v1235 = vld [vmem:[%s0 + $0x7f] sm:$0xff]
  %v1236 = vld [vmem:[%s0 + $0x87] sm:$0xff]
  %v1237 = vld [vmem:[%s0 + $0x8f] sm:$0xff]
  %v1238 = vpack.c.bf16 %v1223, %v1222
  %v1239 = vpack.c.bf16 %v1225, %v1224
  %v1240 = vpack.c.bf16 %v1227, %v1226
  %v1241 = vpack.c.bf16 %v1229, %v1228
  %v1242 = vpack.c.bf16 %v1231, %v1230
  %v1243 = vpack.c.bf16 %v1233, %v1232
  %v1244 = vpack.c.bf16 %v1235, %v1234
  %v1245 = vpack.c.bf16 %v1237, %v1236
  %s1246 = scalar_lea.vmem %s1, 240
  %v1247 = vld [vmem:[%s1246] sm:$0xf]
  %v1248 = vld [vmem:[%s1246 + $0x4] sm:$0xf]
  %v1249 = vld [vmem:[%s1246 + $0x8] sm:$0xf]
  %v1250 = vld [vmem:[%s1246 + $0xc] sm:$0xf]
  %v1251 = vld [vmem:[%s1246 + $0x10] sm:$0xf]
  %v1252 = vld [vmem:[%s1246 + $0x14] sm:$0xf]
  %v1253 = vld [vmem:[%s1246 + $0x18] sm:$0xf]
  %v1254 = vld [vmem:[%s1246 + $0x1c] sm:$0xf]
  %v1255 = vld [vmem:[%s1246 + $0x20] sm:$0xf]
  %v1256 = vld [vmem:[%s1246 + $0x24] sm:$0x1]
  %v1267 = vunpack.c.l.b16 %v1247
  %v1268 = vunpack.c.l.b16 %v1248
  %v1269 = vunpack.c.l.b16 %v1249
  %v1270 = vunpack.c.l.b16 %v1250
  %v1271 = vunpack.c.l.b16 %v1251
  %v1272 = vunpack.c.l.b16 %v1252
  %v1273 = vunpack.c.l.b16 %v1253
  %v1274 = vunpack.c.l.b16 %v1254
  %v1275 = vunpack.c.l.b16 %v1255
  %v1276 = vunpack.c.l.b16 %v1256
  %v1277 = vpack.c.b16 %v1268, %v1267
  %v1278 = vpack.c.b16 %v1270, %v1269
  %v1279 = vpack.c.b16 %v1272, %v1271
  %v1280 = vpack.c.b16 %v1274, %v1273
  %v1281 = vpack.c.b16 %v1276, %v1275
  %v1287 = vsel %vm127, %v1238, 0
  %v1290 = vsel %vm127, %v1239, 0
  %v1293 = vsel %vm127, %v1240, 0
  %v1296 = vsel %vm127, %v1241, 0
  %v1299 = vsel %vm127, %v1242, 0
  %v1302 = vsel %vm127, %v1243, 0
  %v1305 = vsel %vm127, %v1244, 0
  %v1308 = vsel %vm127, %v1245, 0
  %v1311 = vsel %vm152, %v1281, 0
  %1313 = vmatprep.subr.bf16.mxu0 0
  %1314 = vmatpush1.bf16.msra.mxu0 %v1277
  %1315 = vmatprep.subr.bf16.mxu0 0
  %1316 = vmatpush1.bf16.msra.mxu0 %v1278
  %1317 = vmatprep.subr.bf16.mxu0 0
  %1318 = vmatpush1.bf16.msra.mxu0 %v1279
  %1319 = vmatprep.subr.bf16.mxu0 0
  %1320 = vmatpush1.bf16.msra.mxu0 %v1280
  %1321 = vmatprep.subr.bf16.mxu0 0
  %1322 = vmatpush1.bf16.msra.mxu0 %v1311
  %1323 = vmatprep.subr.bf16.mxu0 0
  %1324 = vmatpush1.bf16.msra.mxu0 0
  %1325 = vmatprep.subr.bf16.mxu0 0
  %1326 = vmatpush1.bf16.msra.mxu0 0
  %1327 = vmatprep.subr.bf16.mxu0 0
  %1328 = vmatpush1.bf16.msra.mxu0 0
  %1329 = vmatprep.subr.bf16.mxu0 0
  %1330 = vmatpush1.bf16.msra.mxu0 0
  %1331 = vmatprep.subr.bf16.mxu0 0
  %1332 = vmatpush1.bf16.msra.mxu0 0
  %1333 = vmatprep.subr.bf16.mxu0 0
  %1334 = vmatpush1.bf16.msra.mxu0 0
  %1335 = vmatprep.subr.bf16.mxu0 0
  %1336 = vmatpush1.bf16.msra.mxu0 0
  %1337 = vmatprep.subr.bf16.mxu0 0
  %1338 = vmatpush1.bf16.msra.mxu0 0
  %1339 = vmatprep.subr.bf16.mxu0 0
  %1340 = vmatpush1.bf16.msra.mxu0 0
  %1341 = vmatprep.subr.bf16.mxu0 0
  %1342 = vmatpush1.bf16.msra.mxu0 0
  %1343 = vmatprep.subr.bf16.mxu0 0
  %1344 = vmatpush1.bf16.msra.mxu0 0
  %1345 = vmatprep.mubr.bf16.mxu0 0
  %1346 = vmatmul.mubr.bf16.gmra.mrb[0].mxu0 %v1287
  %v1347 = vpop.f32.mrb[0].mxu0
  %v1348 = vadd.f32 0.0, %v1347
  %v1349 = vpop.f32.mrb[0].mxu0
  %v1350 = vpop.f32.mrb[0].mxu0
  %v1351 = vadd.f32 0.0, %v1350
  %v1352 = vpop.f32.mrb[0].mxu0
  %1353 = vmatprep.mubr.bf16.mxu0 0
  %1354 = vmatmul.mubr.bf16.gmra.mrb[0].mxu0 %v1290
  %v1355 = vpop.f32.mrb[0].mxu0
  %v1356 = vadd.f32 0.0, %v1355
  %v1357 = vpop.f32.mrb[0].mxu0
  %v1358 = vpop.f32.mrb[0].mxu0
  %v1359 = vadd.f32 0.0, %v1358
  %v1360 = vpop.f32.mrb[0].mxu0
  %1361 = vmatprep.mubr.bf16.mxu0 0
  %1362 = vmatmul.mubr.bf16.gmra.mrb[0].mxu0 %v1293
  %v1363 = vpop.f32.mrb[0].mxu0
  %v1364 = vadd.f32 0.0, %v1363
  %v1365 = vpop.f32.mrb[0].mxu0
  %v1366 = vpop.f32.mrb[0].mxu0
  %v1367 = vadd.f32 0.0, %v1366
  %v1368 = vpop.f32.mrb[0].mxu0
  %1369 = vmatprep.mubr.bf16.mxu0 0
  %1370 = vmatmul.mubr.bf16.gmra.mrb[0].mxu0 %v1296
  %v1371 = vpop.f32.mrb[0].mxu0
  %v1372 = vadd.f32 0.0, %v1371
  %v1373 = vpop.f32.mrb[0].mxu0
  %v1374 = vpop.f32.mrb[0].mxu0
  %v1375 = vadd.f32 0.0, %v1374
  %v1376 = vpop.f32.mrb[0].mxu0
  %1377 = vmatprep.mubr.bf16.mxu0 0
  %1378 = vmatmul.mubr.bf16.gmra.mrb[0].mxu0 %v1299
  %v1379 = vpop.f32.mrb[0].mxu0
  %v1380 = vadd.f32 0.0, %v1379
  %v1381 = vpop.f32.mrb[0].mxu0
  %v1382 = vpop.f32.mrb[0].mxu0
  %v1383 = vadd.f32 0.0, %v1382
  %v1384 = vpop.f32.mrb[0].mxu0
  %1385 = vmatprep.mubr.bf16.mxu0 0
  %1386 = vmatmul.mubr.bf16.gmra.mrb[0].mxu0 %v1302
  %v1387 = vpop.f32.mrb[0].mxu0
  %v1388 = vadd.f32 0.0, %v1387
  %v1389 = vpop.f32.mrb[0].mxu0
  %v1390 = vpop.f32.mrb[0].mxu0
  %v1391 = vadd.f32 0.0, %v1390
  %v1392 = vpop.f32.mrb[0].mxu0
  %1393 = vmatprep.mubr.bf16.mxu0 0
  %1394 = vmatmul.mubr.bf16.gmra.mrb[0].mxu0 %v1305
  %v1395 = vpop.f32.mrb[0].mxu0
  %v1396 = vadd.f32 0.0, %v1395
  %v1397 = vpop.f32.mrb[0].mxu0
  %v1398 = vpop.f32.mrb[0].mxu0
  %v1399 = vadd.f32 0.0, %v1398
  %v1400 = vpop.f32.mrb[0].mxu0
  %1401 = vmatprep.mubr.bf16.mxu0 0
  %1402 = vmatmul.mubr.bf16.gmra.mrb[0].mxu0 %v1308
  %v1403 = vpop.f32.mrb[0].mxu0
  %v1404 = vadd.f32 0.0, %v1403
  %v1405 = vpop.f32.mrb[0].mxu0
  %v1406 = vpop.f32.mrb[0].mxu0
  %v1407 = vadd.f32 0.0, %v1406
  %v1408 = vpop.f32.mrb[0].mxu0
  %1409 = vdwg.mxu0
  %v1410 = vadd.f32 %v1206, %v1348
  %v1411 = vadd.f32 %v1207, %v1351
  %v1412 = vadd.f32 %v1208, %v1356
  %v1413 = vadd.f32 %v1209, %v1359
  %v1414 = vadd.f32 %v1210, %v1364
  %v1415 = vadd.f32 %v1211, %v1367
  %v1416 = vadd.f32 %v1212, %v1372
  %v1417 = vadd.f32 %v1213, %v1375
  %v1418 = vadd.f32 %v1214, %v1380
  %v1419 = vadd.f32 %v1215, %v1383
  %v1420 = vadd.f32 %v1216, %v1388
  %v1421 = vadd.f32 %v1217, %v1391
  %v1422 = vadd.f32 %v1218, %v1396
  %v1423 = vadd.f32 %v1219, %v1399
  %v1424 = vadd.f32 %v1220, %v1404
  %v1425 = vadd.f32 %v1221, %v1407
  %v1426 = vld [vmem:[%s0 + $0x18] sm:$0xff]
  %v1427 = vld [vmem:[%s0 + $0x20] sm:$0xff]
  %v1428 = vld [vmem:[%s0 + $0x28] sm:$0xff]
  %v1429 = vld [vmem:[%s0 + $0x30] sm:$0xff]
  %v1430 = vld [vmem:[%s0 + $0x38] sm:$0xff]
  %v1431 = vld [vmem:[%s0 + $0x40] sm:$0xff]
  %v1432 = vld [vmem:[%s0 + $0x48] sm:$0xff]
  %v1433 = vld [vmem:[%s0 + $0x50] sm:$0xff]
  %v1434 = vld [vmem:[%s0 + $0x58] sm:$0xff]
  %v1435 = vld [vmem:[%s0 + $0x60] sm:$0xff]
  %v1436 = vld [vmem:[%s0 + $0x68] sm:$0xff]
  %v1437 = vld [vmem:[%s0 + $0x70] sm:$0xff]
  %v1438 = vld [vmem:[%s0 + $0x78] sm:$0xff]
  %v1439 = vld [vmem:[%s0 + $0x80] sm:$0xff]
  %v1440 = vld [vmem:[%s0 + $0x88] sm:$0xff]
  %v1441 = vld [vmem:[%s0 + $0x90] sm:$0xff]
  %v1442 = vpack.c.bf16 %v1427, %v1426
  %v1443 = vpack.c.bf16 %v1429, %v1428
  %v1444 = vpack.c.bf16 %v1431, %v1430
  %v1445 = vpack.c.bf16 %v1433, %v1432
  %v1446 = vpack.c.bf16 %v1435, %v1434
  %v1447 = vpack.c.bf16 %v1437, %v1436
  %v1448 = vpack.c.bf16 %v1439, %v1438
  %v1449 = vpack.c.bf16 %v1441, %v1440
  %s1450 = scalar_lea.vmem %s1, 280
  %v1451 = vld [vmem:[%s1450] sm:$0xf]
  %v1452 = vld [vmem:[%s1450 + $0x4] sm:$0xf]
  %v1453 = vld [vmem:[%s1450 + $0x8] sm:$0xf]
  %v1454 = vld [vmem:[%s1450 + $0xc] sm:$0xf]
  %v1455 = vld [vmem:[%s1450 + $0x10] sm:$0xf]
  %v1456 = vld [vmem:[%s1450 + $0x14] sm:$0xf]
  %v1457 = vld [vmem:[%s1450 + $0x18] sm:$0xf]
  %v1458 = vld [vmem:[%s1450 + $0x1c] sm:$0xf]
  %v1459 = vld [vmem:[%s1450 + $0x20] sm:$0xf]
  %v1460 = vld [vmem:[%s1450 + $0x24] sm:$0x1]
  %v1471 = vunpack.c.l.b16 %v1451
  %v1472 = vunpack.c.l.b16 %v1452
  %v1473 = vunpack.c.l.b16 %v1453
  %v1474 = vunpack.c.l.b16 %v1454
  %v1475 = vunpack.c.l.b16 %v1455
  %v1476 = vunpack.c.l.b16 %v1456
  %v1477 = vunpack.c.l.b16 %v1457
  %v1478 = vunpack.c.l.b16 %v1458
  %v1479 = vunpack.c.l.b16 %v1459
  %v1480 = vunpack.c.l.b16 %v1460
  %v1481 = vpack.c.b16 %v1472, %v1471
  %v1482 = vpack.c.b16 %v1474, %v1473
  %v1483 = vpack.c.b16 %v1476, %v1475
  %v1484 = vpack.c.b16 %v1478, %v1477
  %v1485 = vpack.c.b16 %v1480, %v1479
  %v1491 = vsel %vm127, %v1442, 0
  %v1494 = vsel %vm127, %v1443, 0
  %v1497 = vsel %vm127, %v1444, 0
  %v1500 = vsel %vm127, %v1445, 0
  %v1503 = vsel %vm127, %v1446, 0
  %v1506 = vsel %vm127, %v1447, 0
  %v1509 = vsel %vm127, %v1448, 0
  %v1512 = vsel %vm127, %v1449, 0
  %v1515 = vsel %vm152, %v1485, 0
  %1517 = vmatprep.subr.bf16.mxu0 0
  %1518 = vmatpush1.bf16.msra.mxu0 %v1481
  %1519 = vmatprep.subr.bf16.mxu0 0
  %1520 = vmatpush1.bf16.msra.mxu0 %v1482
  %1521 = vmatprep.subr.bf16.mxu0 0
  %1522 = vmatpush1.bf16.msra.mxu0 %v1483
  %1523 = vmatprep.subr.bf16.mxu0 0
  %1524 = vmatpush1.bf16.msra.mxu0 %v1484
  %1525 = vmatprep.subr.bf16.mxu0 0
  %1526 = vmatpush1.bf16.msra.mxu0 %v1515
  %1527 = vmatprep.subr.bf16.mxu0 0
  %1528 = vmatpush1.bf16.msra.mxu0 0
  %1529 = vmatprep.subr.bf16.mxu0 0
  %1530 = vmatpush1.bf16.msra.mxu0 0
  %1531 = vmatprep.subr.bf16.mxu0 0
  %1532 = vmatpush1.bf16.msra.mxu0 0
  %1533 = vmatprep.subr.bf16.mxu0 0
  %1534 = vmatpush1.bf16.msra.mxu0 0
  %1535 = vmatprep.subr.bf16.mxu0 0
  %1536 = vmatpush1.bf16.msra.mxu0 0
  %1537 = vmatprep.subr.bf16.mxu0 0
  %1538 = vmatpush1.bf16.msra.mxu0 0
  %1539 = vmatprep.subr.bf16.mxu0 0
  %1540 = vmatpush1.bf16.msra.mxu0 0
  %1541 = vmatprep.subr.bf16.mxu0 0
  %1542 = vmatpush1.bf16.msra.mxu0 0
  %1543 = vmatprep.subr.bf16.mxu0 0
  %1544 = vmatpush1.bf16.msra.mxu0 0
  %1545 = vmatprep.subr.bf16.mxu0 0
  %1546 = vmatpush1.bf16.msra.mxu0 0
  %1547 = vmatprep.subr.bf16.mxu0 0
  %1548 = vmatpush1.bf16.msra.mxu0 0
  %1549 = vmatprep.mubr.bf16.mxu0 0
  %1550 = vmatmul.mubr.bf16.gmra.mrb[0].mxu0 %v1491
  %v1551 = vpop.f32.mrb[0].mxu0
  %v1552 = vadd.f32 0.0, %v1551
  %v1553 = vpop.f32.mrb[0].mxu0
  %v1554 = vpop.f32.mrb[0].mxu0
  %v1555 = vadd.f32 0.0, %v1554
  %v1556 = vpop.f32.mrb[0].mxu0
  %1557 = vmatprep.mubr.bf16.mxu0 0
  %1558 = vmatmul.mubr.bf16.gmra.mrb[0].mxu0 %v1494
  %v1559 = vpop.f32.mrb[0].mxu0
  %v1560 = vadd.f32 0.0, %v1559
  %v1561 = vpop.f32.mrb[0].mxu0
  %v1562 = vpop.f32.mrb[0].mxu0
  %v1563 = vadd.f32 0.0, %v1562
  %v1564 = vpop.f32.mrb[0].mxu0
  %1565 = vmatprep.mubr.bf16.mxu0 0
  %1566 = vmatmul.mubr.bf16.gmra.mrb[0].mxu0 %v1497
  %v1567 = vpop.f32.mrb[0].mxu0
  %v1568 = vadd.f32 0.0, %v1567
  %v1569 = vpop.f32.mrb[0].mxu0
  %v1570 = vpop.f32.mrb[0].mxu0
  %v1571 = vadd.f32 0.0, %v1570
  %v1572 = vpop.f32.mrb[0].mxu0
  %1573 = vmatprep.mubr.bf16.mxu0 0
  %1574 = vmatmul.mubr.bf16.gmra.mrb[0].mxu0 %v1500
  %v1575 = vpop.f32.mrb[0].mxu0
  %v1576 = vadd.f32 0.0, %v1575
  %v1577 = vpop.f32.mrb[0].mxu0
  %v1578 = vpop.f32.mrb[0].mxu0
  %v1579 = vadd.f32 0.0, %v1578
  %v1580 = vpop.f32.mrb[0].mxu0
  %1581 = vmatprep.mubr.bf16.mxu0 0
  %1582 = vmatmul.mubr.bf16.gmra.mrb[0].mxu0 %v1503
  %v1583 = vpop.f32.mrb[0].mxu0
  %v1584 = vadd.f32 0.0, %v1583
  %v1585 = vpop.f32.mrb[0].mxu0
  %v1586 = vpop.f32.mrb[0].mxu0
  %v1587 = vadd.f32 0.0, %v1586
  %v1588 = vpop.f32.mrb[0].mxu0
  %1589 = vmatprep.mubr.bf16.mxu0 0
  %1590 = vmatmul.mubr.bf16.gmra.mrb[0].mxu0 %v1506
  %v1591 = vpop.f32.mrb[0].mxu0
  %v1592 = vadd.f32 0.0, %v1591
  %v1593 = vpop.f32.mrb[0].mxu0
  %v1594 = vpop.f32.mrb[0].mxu0
  %v1595 = vadd.f32 0.0, %v1594
  %v1596 = vpop.f32.mrb[0].mxu0
  %1597 = vmatprep.mubr.bf16.mxu0 0
  %1598 = vmatmul.mubr.bf16.gmra.mrb[0].mxu0 %v1509
  %v1599 = vpop.f32.mrb[0].mxu0
  %v1600 = vadd.f32 0.0, %v1599
  %v1601 = vpop.f32.mrb[0].mxu0
  %v1602 = vpop.f32.mrb[0].mxu0
  %v1603 = vadd.f32 0.0, %v1602
  %v1604 = vpop.f32.mrb[0].mxu0
  %1605 = vmatprep.mubr.bf16.mxu0 0
  %1606 = vmatmul.mubr.bf16.gmra.mrb[0].mxu0 %v1512
  %v1607 = vpop.f32.mrb[0].mxu0
  %v1608 = vadd.f32 0.0, %v1607
  %v1609 = vpop.f32.mrb[0].mxu0
  %v1610 = vpop.f32.mrb[0].mxu0
  %v1611 = vadd.f32 0.0, %v1610
  %v1612 = vpop.f32.mrb[0].mxu0
  %1613 = vdwg.mxu0
  %v1614 = vadd.f32 %v1410, %v1552
  %v1615 = vadd.f32 %v1411, %v1555
  %v1616 = vadd.f32 %v1412, %v1560
  %v1617 = vadd.f32 %v1413, %v1563
  %v1618 = vadd.f32 %v1414, %v1568
  %v1619 = vadd.f32 %v1415, %v1571
  %v1620 = vadd.f32 %v1416, %v1576
  %v1621 = vadd.f32 %v1417, %v1579
  %v1622 = vadd.f32 %v1418, %v1584
  %v1623 = vadd.f32 %v1419, %v1587
  %v1624 = vadd.f32 %v1420, %v1592
  %v1625 = vadd.f32 %v1421, %v1595
  %v1626 = vadd.f32 %v1422, %v1600
  %v1627 = vadd.f32 %v1423, %v1603
  %v1628 = vadd.f32 %v1424, %v1608
  %v1629 = vadd.f32 %v1425, %v1611
  %v1630 = vld [vmem:[%s0 + $0x19] sm:$0xff]
  %v1631 = vld [vmem:[%s0 + $0x21] sm:$0xff]
  %v1632 = vld [vmem:[%s0 + $0x29] sm:$0xff]
  %v1633 = vld [vmem:[%s0 + $0x31] sm:$0xff]
  %v1634 = vld [vmem:[%s0 + $0x39] sm:$0xff]
  %v1635 = vld [vmem:[%s0 + $0x41] sm:$0xff]
  %v1636 = vld [vmem:[%s0 + $0x49] sm:$0xff]
  %v1637 = vld [vmem:[%s0 + $0x51] sm:$0xff]
  %v1638 = vld [vmem:[%s0 + $0x59] sm:$0xff]
  %v1639 = vld [vmem:[%s0 + $0x61] sm:$0xff]
  %v1640 = vld [vmem:[%s0 + $0x69] sm:$0xff]
  %v1641 = vld [vmem:[%s0 + $0x71] sm:$0xff]
  %v1642 = vld [vmem:[%s0 + $0x79] sm:$0xff]
  %v1643 = vld [vmem:[%s0 + $0x81] sm:$0xff]
  %v1644 = vld [vmem:[%s0 + $0x89] sm:$0xff]
  %v1645 = vld [vmem:[%s0 + $0x91] sm:$0xff]
  %v1646 = vpack.c.bf16 %v1631, %v1630
  %v1647 = vpack.c.bf16 %v1633, %v1632
  %v1648 = vpack.c.bf16 %v1635, %v1634
  %v1649 = vpack.c.bf16 %v1637, %v1636
  %v1650 = vpack.c.bf16 %v1639, %v1638
  %v1651 = vpack.c.bf16 %v1641, %v1640
  %v1652 = vpack.c.bf16 %v1643, %v1642
  %v1653 = vpack.c.bf16 %v1645, %v1644
  %s1654 = scalar_lea.vmem %s1, 320
  %v1655 = vld [vmem:[%s1654] sm:$0xf]
  %v1656 = vld [vmem:[%s1654 + $0x4] sm:$0xf]
  %v1657 = vld [vmem:[%s1654 + $0x8] sm:$0xf]
  %v1658 = vld [vmem:[%s1654 + $0xc] sm:$0xf]
  %v1659 = vld [vmem:[%s1654 + $0x10] sm:$0xf]
  %v1660 = vld [vmem:[%s1654 + $0x14] sm:$0xf]
  %v1661 = vld [vmem:[%s1654 + $0x18] sm:$0xf]
  %v1662 = vld [vmem:[%s1654 + $0x1c] sm:$0xf]
  %v1663 = vld [vmem:[%s1654 + $0x20] sm:$0xf]
  %v1664 = vld [vmem:[%s1654 + $0x24] sm:$0x1]
  %v1675 = vunpack.c.l.b16 %v1655
  %v1676 = vunpack.c.l.b16 %v1656
  %v1677 = vunpack.c.l.b16 %v1657
  %v1678 = vunpack.c.l.b16 %v1658
  %v1679 = vunpack.c.l.b16 %v1659
  %v1680 = vunpack.c.l.b16 %v1660
  %v1681 = vunpack.c.l.b16 %v1661
  %v1682 = vunpack.c.l.b16 %v1662
  %v1683 = vunpack.c.l.b16 %v1663
  %v1684 = vunpack.c.l.b16 %v1664
  %v1685 = vpack.c.b16 %v1676, %v1675
  %v1686 = vpack.c.b16 %v1678, %v1677
  %v1687 = vpack.c.b16 %v1680, %v1679
  %v1688 = vpack.c.b16 %v1682, %v1681
  %v1689 = vpack.c.b16 %v1684, %v1683
  %v1695 = vsel %vm127, %v1646, 0
  %v1698 = vsel %vm127, %v1647, 0
  %v1701 = vsel %vm127, %v1648, 0
  %v1704 = vsel %vm127, %v1649, 0
  %v1707 = vsel %vm127, %v1650, 0
  %v1710 = vsel %vm127, %v1651, 0
  %v1713 = vsel %vm127, %v1652, 0
  %v1716 = vsel %vm127, %v1653, 0
  %v1719 = vsel %vm152, %v1689, 0
  %1721 = vmatprep.subr.bf16.mxu0 0
  %1722 = vmatpush1.bf16.msra.mxu0 %v1685
  %1723 = vmatprep.subr.bf16.mxu0 0
  %1724 = vmatpush1.bf16.msra.mxu0 %v1686
  %1725 = vmatprep.subr.bf16.mxu0 0
  %1726 = vmatpush1.bf16.msra.mxu0 %v1687
  %1727 = vmatprep.subr.bf16.mxu0 0
  %1728 = vmatpush1.bf16.msra.mxu0 %v1688
  %1729 = vmatprep.subr.bf16.mxu0 0
  %1730 = vmatpush1.bf16.msra.mxu0 %v1719
  %1731 = vmatprep.subr.bf16.mxu0 0
  %1732 = vmatpush1.bf16.msra.mxu0 0
  %1733 = vmatprep.subr.bf16.mxu0 0
  %1734 = vmatpush1.bf16.msra.mxu0 0
  %1735 = vmatprep.subr.bf16.mxu0 0
  %1736 = vmatpush1.bf16.msra.mxu0 0
  %1737 = vmatprep.subr.bf16.mxu0 0
  %1738 = vmatpush1.bf16.msra.mxu0 0
  %1739 = vmatprep.subr.bf16.mxu0 0
  %1740 = vmatpush1.bf16.msra.mxu0 0
  %1741 = vmatprep.subr.bf16.mxu0 0
  %1742 = vmatpush1.bf16.msra.mxu0 0
  %1743 = vmatprep.subr.bf16.mxu0 0
  %1744 = vmatpush1.bf16.msra.mxu0 0
  %1745 = vmatprep.subr.bf16.mxu0 0
  %1746 = vmatpush1.bf16.msra.mxu0 0
  %1747 = vmatprep.subr.bf16.mxu0 0
  %1748 = vmatpush1.bf16.msra.mxu0 0
  %1749 = vmatprep.subr.bf16.mxu0 0
  %1750 = vmatpush1.bf16.msra.mxu0 0
  %1751 = vmatprep.subr.bf16.mxu0 0
  %1752 = vmatpush1.bf16.msra.mxu0 0
  %1753 = vmatprep.mubr.bf16.mxu0 0
  %1754 = vmatmul.mubr.bf16.gmra.mrb[0].mxu0 %v1695
  %v1755 = vpop.f32.mrb[0].mxu0
  %v1756 = vadd.f32 0.0, %v1755
  %v1757 = vpop.f32.mrb[0].mxu0
  %v1758 = vpop.f32.mrb[0].mxu0
  %v1759 = vadd.f32 0.0, %v1758
  %v1760 = vpop.f32.mrb[0].mxu0
  %1761 = vmatprep.mubr.bf16.mxu0 0
  %1762 = vmatmul.mubr.bf16.gmra.mrb[0].mxu0 %v1698
  %v1763 = vpop.f32.mrb[0].mxu0
  %v1764 = vadd.f32 0.0, %v1763
  %v1765 = vpop.f32.mrb[0].mxu0
  %v1766 = vpop.f32.mrb[0].mxu0
  %v1767 = vadd.f32 0.0, %v1766
  %v1768 = vpop.f32.mrb[0].mxu0
  %1769 = vmatprep.mubr.bf16.mxu0 0
  %1770 = vmatmul.mubr.bf16.gmra.mrb[0].mxu0 %v1701
  %v1771 = vpop.f32.mrb[0].mxu0
  %v1772 = vadd.f32 0.0, %v1771
  %v1773 = vpop.f32.mrb[0].mxu0
  %v1774 = vpop.f32.mrb[0].mxu0
  %v1775 = vadd.f32 0.0, %v1774
  %v1776 = vpop.f32.mrb[0].mxu0
  %1777 = vmatprep.mubr.bf16.mxu0 0
  %1778 = vmatmul.mubr.bf16.gmra.mrb[0].mxu0 %v1704
  %v1779 = vpop.f32.mrb[0].mxu0
  %v1780 = vadd.f32 0.0, %v1779
  %v1781 = vpop.f32.mrb[0].mxu0
  %v1782 = vpop.f32.mrb[0].mxu0
  %v1783 = vadd.f32 0.0, %v1782
  %v1784 = vpop.f32.mrb[0].mxu0
  %1785 = vmatprep.mubr.bf16.mxu0 0
  %1786 = vmatmul.mubr.bf16.gmra.mrb[0].mxu0 %v1707
  %v1787 = vpop.f32.mrb[0].mxu0
  %v1788 = vadd.f32 0.0, %v1787
  %v1789 = vpop.f32.mrb[0].mxu0
  %v1790 = vpop.f32.mrb[0].mxu0
  %v1791 = vadd.f32 0.0, %v1790
  %v1792 = vpop.f32.mrb[0].mxu0
  %1793 = vmatprep.mubr.bf16.mxu0 0
  %1794 = vmatmul.mubr.bf16.gmra.mrb[0].mxu0 %v1710
  %v1795 = vpop.f32.mrb[0].mxu0
  %v1796 = vadd.f32 0.0, %v1795
  %v1797 = vpop.f32.mrb[0].mxu0
  %v1798 = vpop.f32.mrb[0].mxu0
  %v1799 = vadd.f32 0.0, %v1798
  %v1800 = vpop.f32.mrb[0].mxu0
  %1801 = vmatprep.mubr.bf16.mxu0 0
  %1802 = vmatmul.mubr.bf16.gmra.mrb[0].mxu0 %v1713
  %v1803 = vpop.f32.mrb[0].mxu0
  %v1804 = vadd.f32 0.0, %v1803
  %v1805 = vpop.f32.mrb[0].mxu0
  %v1806 = vpop.f32.mrb[0].mxu0
  %v1807 = vadd.f32 0.0, %v1806
  %v1808 = vpop.f32.mrb[0].mxu0
  %1809 = vmatprep.mubr.bf16.mxu0 0
  %1810 = vmatmul.mubr.bf16.gmra.mrb[0].mxu0 %v1716
  %v1811 = vpop.f32.mrb[0].mxu0
  %v1812 = vadd.f32 0.0, %v1811
  %v1813 = vpop.f32.mrb[0].mxu0
  %v1814 = vpop.f32.mrb[0].mxu0
  %v1815 = vadd.f32 0.0, %v1814
  %v1816 = vpop.f32.mrb[0].mxu0
  %1817 = vdwg.mxu0
  %v1818 = vadd.f32 %v1614, %v1756
  %v1819 = vadd.f32 %v1615, %v1759
  %v1820 = vadd.f32 %v1616, %v1764
  %v1821 = vadd.f32 %v1617, %v1767
  %v1822 = vadd.f32 %v1618, %v1772
  %v1823 = vadd.f32 %v1619, %v1775
  %v1824 = vadd.f32 %v1620, %v1780
  %v1825 = vadd.f32 %v1621, %v1783
  %v1826 = vadd.f32 %v1622, %v1788
  %v1827 = vadd.f32 %v1623, %v1791
  %v1828 = vadd.f32 %v1624, %v1796
  %v1829 = vadd.f32 %v1625, %v1799
  %v1830 = vadd.f32 %v1626, %v1804
  %v1831 = vadd.f32 %v1627, %v1807
  %v1832 = vadd.f32 %v1628, %v1812
  %v1833 = vadd.f32 %v1629, %v1815
  %v1834 = vld [vmem:[%s5] sm:$0xff]
  %v1835 = vld [vmem:[%s5 + $0x8] sm:$0xff]
  %v1836 = vld [vmem:[%s5 + $0x10] sm:$0xff]
  %v1837 = vld [vmem:[%s5 + $0x18] sm:$0xff]
  %v1838 = vld [vmem:[%s5 + $0x20] sm:$0xff]
  %v1839 = vld [vmem:[%s5 + $0x28] sm:$0xff]
  %v1840 = vld [vmem:[%s5 + $0x30] sm:$0xff]
  %v1841 = vld [vmem:[%s5 + $0x38] sm:$0xff]
  %1843 = vset.pattern.permute.xlu0 0
  %1844 = vperm.xlu0 %1843, %v1834
  %v1845 = vpop.permute.xlu0 %1844
  %1848 = vset.pattern.permute.xlu0 0
  %1849 = vperm.xlu0 %1848, %v1835
  %v1850 = vpop.permute.xlu0 %1849
  %1853 = vset.pattern.permute.xlu0 0
  %1854 = vperm.xlu0 %1853, %v1836
  %v1855 = vpop.permute.xlu0 %1854
  %1858 = vset.pattern.permute.xlu0 0
  %1859 = vperm.xlu0 %1858, %v1837
  %v1860 = vpop.permute.xlu0 %1859
  %1863 = vset.pattern.permute.xlu0 0
  %1864 = vperm.xlu0 %1863, %v1838
  %v1865 = vpop.permute.xlu0 %1864
  %1868 = vset.pattern.permute.xlu0 0
  %1869 = vperm.xlu0 %1868, %v1839
  %v1870 = vpop.permute.xlu0 %1869
  %1873 = vset.pattern.permute.xlu0 0
  %1874 = vperm.xlu0 %1873, %v1840
  %v1875 = vpop.permute.xlu0 %1874
  %1878 = vset.pattern.permute.xlu0 0
  %1879 = vperm.xlu0 %1878, %v1841
  %v1880 = vpop.permute.xlu0 %1879
  %v1882 = vmul.f32 %v1818, %v1845
  %v1883 = vmul.f32 %v1819, %v1850
  %v1884 = vmul.f32 %v1820, %v1855
  %v1885 = vmul.f32 %v1821, %v1860
  %v1886 = vmul.f32 %v1822, %v1865
  %v1887 = vmul.f32 %v1823, %v1870
  %v1888 = vmul.f32 %v1824, %v1875
  %v1889 = vmul.f32 %v1825, %v1880
  %v1890 = vmul.f32 %v1826, %v1845
  %v1891 = vmul.f32 %v1827, %v1850
  %v1892 = vmul.f32 %v1828, %v1855
  %v1893 = vmul.f32 %v1829, %v1860
  %v1894 = vmul.f32 %v1830, %v1865
  %v1895 = vmul.f32 %v1831, %v1870
  %v1896 = vmul.f32 %v1832, %v1875
  %v1897 = vmul.f32 %v1833, %v1880
  %vm1898 = vcmask 523264
  %v1899 = vsel %vm1898, %v1882, 0.0
  %v1900 = vsel %vm1898, %v1890, 0.0
  %v1901 = vadd.f32 %v1899, %v1900
  %v1902 = vsel %vm1898, %v1883, 0.0
  %v1903 = vsel %vm1898, %v1891, 0.0
  %v1904 = vadd.f32 %v1902, %v1903
  %v1905 = vsel %vm1898, %v1884, 0.0
  %v1906 = vsel %vm1898, %v1892, 0.0
  %v1907 = vadd.f32 %v1905, %v1906
  %v1908 = vsel %vm1898, %v1885, 0.0
  %v1909 = vsel %vm1898, %v1893, 0.0
  %v1910 = vadd.f32 %v1908, %v1909
  %v1911 = vsel %vm1898, %v1886, 0.0
  %v1912 = vsel %vm1898, %v1894, 0.0
  %v1913 = vadd.f32 %v1911, %v1912
  %v1914 = vsel %vm1898, %v1887, 0.0
  %v1915 = vsel %vm1898, %v1895, 0.0
  %v1916 = vadd.f32 %v1914, %v1915
  %v1917 = vsel %vm1898, %v1888, 0.0
  %v1918 = vsel %vm1898, %v1896, 0.0
  %v1919 = vadd.f32 %v1917, %v1918
  %v1920 = vsel %vm1898, %v1889, 0.0
  %v1921 = vsel %vm1898, %v1897, 0.0
  %v1922 = vadd.f32 %v1920, %v1921
  %v1923 = vsel %vm1898, %v1901, 0.0
  %v1924 = vsel %vm1898, %v1904, 0.0
  %v1925 = vadd.f32 %v1923, %v1924
  %v1926 = vsel %vm1898, %v1907, 0.0
  %v1927 = vadd.f32 %v1925, %v1926
  %v1928 = vsel %vm1898, %v1910, 0.0
  %v1929 = vadd.f32 %v1927, %v1928
  %v1930 = vsel %vm1898, %v1913, 0.0
  %v1931 = vadd.f32 %v1929, %v1930
  %v1932 = vsel %vm1898, %v1916, 0.0
  %v1933 = vadd.f32 %v1931, %v1932
  %v1934 = vsel %vm1898, %v1919, 0.0
  %v1935 = vadd.f32 %v1933, %v1934
  %v1936 = vsel %vm1898, %v1922, 0.0
  %v1937 = vadd.f32 %v1935, %v1936
  %v1938 = vrot.slane %v1937, 4
  %v1939 = vadd.f32 %v1937, %v1938
  %v1940 = vrot.slane %v1939, 2
  %v1941 = vadd.f32 %v1939, %v1940
  %v1942 = vrot.slane %v1941, 1
  %v1943 = vadd.f32 %v1941, %v1942
  %v1944 = vmul.f32 %v1882, %v1882
  %v1945 = vmul.f32 %v1883, %v1883
  %v1946 = vmul.f32 %v1884, %v1884
  %v1947 = vmul.f32 %v1885, %v1885
  %v1948 = vmul.f32 %v1886, %v1886
  %v1949 = vmul.f32 %v1887, %v1887
  %v1950 = vmul.f32 %v1888, %v1888
  %v1951 = vmul.f32 %v1889, %v1889
  %v1952 = vmul.f32 %v1890, %v1890
  %v1953 = vmul.f32 %v1891, %v1891
  %v1954 = vmul.f32 %v1892, %v1892
  %v1955 = vmul.f32 %v1893, %v1893
  %v1956 = vmul.f32 %v1894, %v1894
  %v1957 = vmul.f32 %v1895, %v1895
  %v1958 = vmul.f32 %v1896, %v1896
  %v1959 = vmul.f32 %v1897, %v1897
  %v1960 = vsel %vm1898, %v1944, 0.0
  %v1961 = vsel %vm1898, %v1952, 0.0
  %v1962 = vadd.f32 %v1960, %v1961
  %v1963 = vsel %vm1898, %v1945, 0.0
  %v1964 = vsel %vm1898, %v1953, 0.0
  %v1965 = vadd.f32 %v1963, %v1964
  %v1966 = vsel %vm1898, %v1946, 0.0
  %v1967 = vsel %vm1898, %v1954, 0.0
  %v1968 = vadd.f32 %v1966, %v1967
  %v1969 = vsel %vm1898, %v1947, 0.0
  %v1970 = vsel %vm1898, %v1955, 0.0
  %v1971 = vadd.f32 %v1969, %v1970
  %v1972 = vsel %vm1898, %v1948, 0.0
  %v1973 = vsel %vm1898, %v1956, 0.0
  %v1974 = vadd.f32 %v1972, %v1973
  %v1975 = vsel %vm1898, %v1949, 0.0
  %v1976 = vsel %vm1898, %v1957, 0.0
  %v1977 = vadd.f32 %v1975, %v1976
  %v1978 = vsel %vm1898, %v1950, 0.0
  %v1979 = vsel %vm1898, %v1958, 0.0
  %v1980 = vadd.f32 %v1978, %v1979
  %v1981 = vsel %vm1898, %v1951, 0.0
  %v1982 = vsel %vm1898, %v1959, 0.0
  %v1983 = vadd.f32 %v1981, %v1982
  %v1984 = vsel %vm1898, %v1962, 0.0
  %v1985 = vsel %vm1898, %v1965, 0.0
  %v1986 = vadd.f32 %v1984, %v1985
  %v1987 = vsel %vm1898, %v1968, 0.0
  %v1988 = vadd.f32 %v1986, %v1987
  %v1989 = vsel %vm1898, %v1971, 0.0
  %v1990 = vadd.f32 %v1988, %v1989
  %v1991 = vsel %vm1898, %v1974, 0.0
  %v1992 = vadd.f32 %v1990, %v1991
  %v1993 = vsel %vm1898, %v1977, 0.0
  %v1994 = vadd.f32 %v1992, %v1993
  %v1995 = vsel %vm1898, %v1980, 0.0
  %v1996 = vadd.f32 %v1994, %v1995
  %v1997 = vsel %vm1898, %v1983, 0.0
  %v1998 = vadd.f32 %v1996, %v1997
  %v1999 = vrot.slane %v1998, 4
  %v2000 = vadd.f32 %v1998, %v1999
  %v2001 = vrot.slane %v2000, 2
  %v2002 = vadd.f32 %v2000, %v2001
  %v2003 = vrot.slane %v2002, 1
  %v2004 = vadd.f32 %v2002, %v2003
  %v2005 = vmul.f32 %v1943, 0.03125
  %v2006 = vmul.f32 %v2004, 0.03125
  %v2007 = vmul.f32 %v2005, %v2005
  %v2008 = vsub.f32 %v2006, %v2007
  %v2009 = vld [vmem:[%s2] sm:$0x1]
  %v2010 = vadd.f32 %v2008, 1e-05
  %v2011 = vrsqrt.pop %v2010
  %v2012 = vmul.f32 %v2009, %v2011
  %v2013 = vld [vmem:[%s3] sm:$0x1]
  %v2014 = vmul.f32 %v2005, %v2012
  %v2015 = vsub.f32 %v2013, %v2014
  %v2017 = vlaneseq
  %v2018 = vshrl.u32 %v2017, 7
  %v2019 = vsub.s32 0, %v2018
  %v2020 = vrot.slane %v2012, %v2019
  %v2022 = vmul.f32 %v1818, %v2020
  %v2023 = vmul.f32 %v1819, %v2020
  %v2024 = vmul.f32 %v1820, %v2020
  %v2025 = vmul.f32 %v1821, %v2020
  %v2026 = vmul.f32 %v1822, %v2020
  %v2027 = vmul.f32 %v1823, %v2020
  %v2028 = vmul.f32 %v1824, %v2020
  %v2029 = vmul.f32 %v1825, %v2020
  %v2030 = vmul.f32 %v1826, %v2020
  %v2031 = vmul.f32 %v1827, %v2020
  %v2032 = vmul.f32 %v1828, %v2020
  %v2033 = vmul.f32 %v1829, %v2020
  %v2034 = vmul.f32 %v1830, %v2020
  %v2035 = vmul.f32 %v1831, %v2020
  %v2036 = vmul.f32 %v1832, %v2020
  %v2037 = vmul.f32 %v1833, %v2020
  %v2039 = vlaneseq
  %v2040 = vshrl.u32 %v2039, 7
  %v2041 = vsub.s32 0, %v2040
  %v2042 = vrot.slane %v2015, %v2041
  %v2044 = vadd.f32 %v2022, %v2042
  %v2045 = vadd.f32 %v2023, %v2042
  %v2046 = vadd.f32 %v2024, %v2042
  %v2047 = vadd.f32 %v2025, %v2042
  %v2048 = vadd.f32 %v2026, %v2042
  %v2049 = vadd.f32 %v2027, %v2042
  %v2050 = vadd.f32 %v2028, %v2042
  %v2051 = vadd.f32 %v2029, %v2042
  %v2052 = vadd.f32 %v2030, %v2042
  %v2053 = vadd.f32 %v2031, %v2042
  %v2054 = vadd.f32 %v2032, %v2042
  %v2055 = vadd.f32 %v2033, %v2042
  %v2056 = vadd.f32 %v2034, %v2042
  %v2057 = vadd.f32 %v2035, %v2042
  %v2058 = vadd.f32 %v2036, %v2042
  %v2059 = vadd.f32 %v2037, %v2042
  %vm2060 = vcmp.ge.f32.partialorder %v2044, 0.0
  %vm2061 = vcmp.ge.f32.partialorder %v2045, 0.0
  %vm2062 = vcmp.ge.f32.partialorder %v2046, 0.0
  %vm2063 = vcmp.ge.f32.partialorder %v2047, 0.0
  %vm2064 = vcmp.ge.f32.partialorder %v2048, 0.0
  %vm2065 = vcmp.ge.f32.partialorder %v2049, 0.0
  %vm2066 = vcmp.ge.f32.partialorder %v2050, 0.0
  %vm2067 = vcmp.ge.f32.partialorder %v2051, 0.0
  %vm2068 = vcmp.ge.f32.partialorder %v2052, 0.0
  %vm2069 = vcmp.ge.f32.partialorder %v2053, 0.0
  %vm2070 = vcmp.ge.f32.partialorder %v2054, 0.0
  %vm2071 = vcmp.ge.f32.partialorder %v2055, 0.0
  %vm2072 = vcmp.ge.f32.partialorder %v2056, 0.0
  %vm2073 = vcmp.ge.f32.partialorder %v2057, 0.0
  %vm2074 = vcmp.ge.f32.partialorder %v2058, 0.0
  %vm2075 = vcmp.ge.f32.partialorder %v2059, 0.0
  %v2076 = vmul.f32 %v2044, 0.2
  %v2077 = vmul.f32 %v2045, 0.2
  %v2078 = vmul.f32 %v2046, 0.2
  %v2079 = vmul.f32 %v2047, 0.2
  %v2080 = vmul.f32 %v2048, 0.2
  %v2081 = vmul.f32 %v2049, 0.2
  %v2082 = vmul.f32 %v2050, 0.2
  %v2083 = vmul.f32 %v2051, 0.2
  %v2084 = vmul.f32 %v2052, 0.2
  %v2085 = vmul.f32 %v2053, 0.2
  %v2086 = vmul.f32 %v2054, 0.2
  %v2087 = vmul.f32 %v2055, 0.2
  %v2088 = vmul.f32 %v2056, 0.2
  %v2089 = vmul.f32 %v2057, 0.2
  %v2090 = vmul.f32 %v2058, 0.2
  %v2091 = vmul.f32 %v2059, 0.2
  %v2092 = vsel %vm2060, %v2044, %v2076
  %v2093 = vsel %vm2061, %v2045, %v2077
  %v2094 = vsel %vm2062, %v2046, %v2078
  %v2095 = vsel %vm2063, %v2047, %v2079
  %v2096 = vsel %vm2064, %v2048, %v2080
  %v2097 = vsel %vm2065, %v2049, %v2081
  %v2098 = vsel %vm2066, %v2050, %v2082
  %v2099 = vsel %vm2067, %v2051, %v2083
  %v2100 = vsel %vm2068, %v2052, %v2084
  %v2101 = vsel %vm2069, %v2053, %v2085
  %v2102 = vsel %vm2070, %v2054, %v2086
  %v2103 = vsel %vm2071, %v2055, %v2087
  %v2104 = vsel %vm2072, %v2056, %v2088
  %v2105 = vsel %vm2073, %v2057, %v2089
  %v2106 = vsel %vm2074, %v2058, %v2090
  %v2107 = vsel %vm2075, %v2059, %v2091
  %v2108 = vld [vmem:[%s4] sm:$0xff]
  %v2109 = vld [vmem:[%s4 + $0x8] sm:$0xff]
  %v2110 = vld [vmem:[%s4 + $0x10] sm:$0xff]
  %v2111 = vld [vmem:[%s4 + $0x18] sm:$0xff]
  %v2112 = vld [vmem:[%s4 + $0x20] sm:$0xff]
  %v2113 = vld [vmem:[%s4 + $0x28] sm:$0xff]
  %v2114 = vld [vmem:[%s4 + $0x30] sm:$0xff]
  %v2115 = vld [vmem:[%s4 + $0x38] sm:$0xff]
  %v2116 = vmul.f32 %v2092, %v2108
  %v2117 = vmul.f32 %v2093, %v2109
  %v2118 = vmul.f32 %v2094, %v2110
  %v2119 = vmul.f32 %v2095, %v2111
  %v2120 = vmul.f32 %v2096, %v2112
  %v2121 = vmul.f32 %v2097, %v2113
  %v2122 = vmul.f32 %v2098, %v2114
  %v2123 = vmul.f32 %v2099, %v2115
  %v2124 = vmul.f32 %v2100, %v2108
  %v2125 = vmul.f32 %v2101, %v2109
  %v2126 = vmul.f32 %v2102, %v2110
  %v2127 = vmul.f32 %v2103, %v2111
  %v2128 = vmul.f32 %v2104, %v2112
  %v2129 = vmul.f32 %v2105, %v2113
  %v2130 = vmul.f32 %v2106, %v2114
  %v2131 = vmul.f32 %v2107, %v2115
  %v2132 = vsel %vm1898, %v2116, 0.0
  %v2133 = vsel %vm1898, %v2117, 0.0
  %v2134 = vadd.f32 %v2132, %v2133
  %v2135 = vsel %vm1898, %v2118, 0.0
  %v2136 = vadd.f32 %v2134, %v2135
  %v2137 = vsel %vm1898, %v2119, 0.0
  %v2138 = vadd.f32 %v2136, %v2137
  %v2139 = vsel %vm1898, %v2120, 0.0
  %v2140 = vadd.f32 %v2138, %v2139
  %v2141 = vsel %vm1898, %v2121, 0.0
  %v2142 = vadd.f32 %v2140, %v2141
  %v2143 = vsel %vm1898, %v2122, 0.0
  %v2144 = vadd.f32 %v2142, %v2143
  %v2145 = vsel %vm1898, %v2123, 0.0
  %v2146 = vadd.f32 %v2144, %v2145
  %v2147 = vrot.slane %v2146, 4
  %v2148 = vadd.f32 %v2146, %v2147
  %v2149 = vrot.slane %v2148, 2
  %v2150 = vadd.f32 %v2148, %v2149
  %v2151 = vrot.slane %v2150, 1
  %v2152 = vadd.f32 %v2150, %v2151
  %v2153 = vsel %vm1898, %v2124, 0.0
  %v2154 = vsel %vm1898, %v2125, 0.0
  %v2155 = vadd.f32 %v2153, %v2154
  %v2156 = vsel %vm1898, %v2126, 0.0
  %v2157 = vadd.f32 %v2155, %v2156
  %v2158 = vsel %vm1898, %v2127, 0.0
  %v2159 = vadd.f32 %v2157, %v2158
  %v2160 = vsel %vm1898, %v2128, 0.0
  %v2161 = vadd.f32 %v2159, %v2160
  %v2162 = vsel %vm1898, %v2129, 0.0
  %v2163 = vadd.f32 %v2161, %v2162
  %v2164 = vsel %vm1898, %v2130, 0.0
  %v2165 = vadd.f32 %v2163, %v2164
  %v2166 = vsel %vm1898, %v2131, 0.0
  %v2167 = vadd.f32 %v2165, %v2166
  %v2168 = vrot.slane %v2167, 4
  %v2169 = vadd.f32 %v2167, %v2168
  %v2170 = vrot.slane %v2169, 2
  %v2171 = vadd.f32 %v2169, %v2170
  %v2172 = vrot.slane %v2171, 1
  %v2173 = vadd.f32 %v2171, %v2172
  %vm2176 = vcmask 1041409
  %v2177 = vsel %vm2176, %v2173, %v2152
  %vm2179 = vcmask 517120
  %v2180 = vsel %vm2179, %v2177, 0.0
  %2181 = vadd.xlane.f32.xlu0 %v2180
  %v2182 = vpop.xlane.xlu0 %2181
  %v2183 = vld [vmem:[#allocation2] sm:$0x1]
  %v2185 = vlaneseq
  %v2186 = vshrl.u32 %v2185, 7
  %v2187 = vsub.s32 0, %v2186
  %v2188 = vrot.slane %v2183, %v2187
  %v2190 = vadd.f32 %v2182, %v2188
  %vm2191 = vcmask 1024
  %2192 = vst.msk [vmem:[%s7] sm:$0x3] %vm2191, %v2190
  // Predicated region
  $region30: #{d_get_logits.1} parent=0 // pred_check
    _
  $region31: #{d_get_logits.1} parent=0 // pred_check_branch
    %2194 = sbr.rel (0) target = $region33
  $region32: #{d_get_logits.1} parent=0 // pred_region
    _
  $region33: #{d_get_logits.1} parent=0 // pred_fallthru
    _
  // Predicated region
  $region34: #{d_get_logits.1} parent=0 // pred_check
    _
  $region35: #{d_get_logits.1} parent=0 // pred_check_branch
    %2196 = sbr.rel (0) target = $region37
  $region36: #{d_get_logits.1} parent=0 // pred_region
    _
  $region37: #{d_get_logits.1} parent=0 // pred_fallthru
    _

</llo_original>
